<compile_context>
chip_gen: v7x
topology: tpu7x:2x2x1
jax: 0.10.0
libtpu: 0.0.40
codegen_flags: <defaults>
</compile_context>

<pallas_src>
import functools
import numpy as np
import jax
import jax.numpy as jnp
from jax.experimental import pallas as pl
from jax.experimental.pallas import tpu as pltpu


EPS = 1e-5


# ----------------------------------------------------------------------------
# Graph utilities (numpy) — mirror MS-G3D's k_adjacency / normalization
# ----------------------------------------------------------------------------
def k_adjacency(A, k, with_self=False, self_factor=1):
    I = np.eye(len(A), dtype=A.dtype)
    if k == 0:
        return I
    Ak = np.minimum(np.linalg.matrix_power(A + I, k), 1) \
       - np.minimum(np.linalg.matrix_power(A + I, k - 1), 1)
    if with_self:
        Ak += self_factor * I
    return Ak


def normalize_adjacency_matrix(A):
    node_degrees = A.sum(-1)
    degs_inv_sqrt = np.power(node_degrees, -0.5)
    norm_degs_matrix = np.eye(len(node_degrees)) * degs_inv_sqrt
    return (norm_degs_matrix @ A @ norm_degs_matrix).astype(np.float32)


def build_spatial_temporal_graph(A_binary, window_size):
    V = len(A_binary)
    A_with_I = A_binary + np.eye(V, dtype=A_binary.dtype)
    return np.tile(A_with_I, (window_size, window_size)).copy()


def build_A_scales(A_binary, num_scales, window_size):
    A_large = build_spatial_temporal_graph(A_binary, window_size)
    mats = [k_adjacency(A_large, k, with_self=True) for k in range(num_scales)]
    return np.concatenate([normalize_adjacency_matrix(g) for g in mats], axis=0)


# ----------------------------------------------------------------------------
# Temporal unfold glue (XLA side)
# ----------------------------------------------------------------------------
def unfold_temporal_windows(x, window_size, window_stride, window_dilation):
    # NCHW version (used by the pure-JAX reference).
    # x: (N, C, T, V)  ->  (N, C, T_out, window_size*V), last index = w*V + v
    N, C, T, V = x.shape
    pad = (window_size + (window_size - 1) * (window_dilation - 1) - 1) // 2
    xp = jnp.pad(x, ((0, 0), (0, 0), (pad, pad), (0, 0)))
    Tp = T + 2 * pad
    T_out = (Tp - (window_dilation * (window_size - 1) + 1)) // window_stride + 1
    slices = []
    for w in range(window_size):
        start = w * window_dilation
        stop = start + (T_out - 1) * window_stride + 1
        slices.append(xp[:, :, start:stop:window_stride, :])
    xw = jnp.stack(slices, axis=3)                      # (N, C, T_out, W, V)
    return xw.reshape(N, C, T_out, window_size * V)


def unfold_to_rows(x, window_size, window_stride, window_dilation):
    # Channels-last, single pass: x (N,C,T,V) -> rows (N*Tw, W*V*C), cols (w, v, c).
    N, C, T, V = x.shape
    pad = (window_size + (window_size - 1) * (window_dilation - 1) - 1) // 2
    x_cl = jnp.transpose(x, (0, 2, 3, 1))               # (N, T, V, C)
    x_cl = jnp.pad(x_cl, ((0, 0), (pad, pad), (0, 0), (0, 0)))
    Tp = T + 2 * pad
    Tw = (Tp - (window_dilation * (window_size - 1) + 1)) // window_stride + 1
    cols = []
    for w in range(window_size):
        start = w * window_dilation
        stop = start + (Tw - 1) * window_stride + 1
        cols.append(x_cl[:, start:stop:window_stride])  # (N, Tw, V, C)
    xw = jnp.stack(cols, axis=2)                        # (N, Tw, W, V, C)
    return xw.reshape(N * Tw, window_size * V * C), Tw


def _round_up(x, m):
    return (x + m - 1) // m * m


def _vmem_capacity_bytes():
    try:
        return int(pltpu.get_tpu_info().vmem_capacity_bytes)
    except Exception:
        return 64 * 1024 * 1024           # conservative (v7x per-TC VMEM)


def _choose_joint_group(V, d_in_p, wo1p, w_itemsize, vmem_cap):
    # Keep the double-buffered K1 column block under ~25% of VMEM.
    per_joint = 2 * d_in_p * wo1p * w_itemsize
    g = max(1, min(V, int(0.25 * vmem_cap) // max(per_joint, 1)))
    ng = -(-V // g)
    g = -(-V // ng)                        # rebalance groups
    return g, ng


def _choose_row_block(NT, d_in_p, g, wo1p, o2p, w_itemsize, x_itemsize,
                      row_align, cap, vmem_cap):
    budget = int(0.70 * vmem_cap)
    # Resident weights: double-buffered K1/sh1 column blocks + single K2/sh2.
    fixed = 2 * (d_in_p * g * wo1p + g * wo1p) * w_itemsize \
          + (wo1p * o2p) * w_itemsize + o2p * 4
    # Per-row: double-buffered X block (compute dtype) + f32 output block.
    per_row = 2 * (d_in_p * x_itemsize + g * o2p * 4)
    avail = max(budget - fixed, row_align * per_row)
    r = min(cap, avail // per_row, _round_up(NT, row_align))
    r = max(row_align, (r // row_align) * row_align)
    est = fixed + per_row * r + (2 << 20)
    vmem_limit = int(min(max(2 * est, 32 << 20), int(0.92 * vmem_cap)))
    return int(r), int(vmem_limit)


# ----------------------------------------------------------------------------
# Fused kernel.  Per grid step (row block i, joint group g):
#   H = relu( X(R, D_in_p) @ K1_g(D_in_p, G*WO1p) + sh1_g )      (GCN+1x1+BN1)
#   for each joint j in the group (lane-aligned slices):
#     OUT[:, j] = H[:, j] @ K2(WO1p, O2p) + sh2                  (out_conv+BN2)
# BN scales / conv biases pre-folded into K1/K2/sh1/sh2; accumulation is f32.
# ----------------------------------------------------------------------------
def ms_g3d_fused_kernel(x_ref, k1_ref, sh1_ref, k2_ref, sh2_ref, o_ref,
                        *, joints_per_group, wo1p, o2p):
    h = jnp.dot(x_ref[...], k1_ref[...], preferred_element_type=jnp.float32)
    h = jnp.maximum(h + sh1_ref[...], 0.0)
    h = h.astype(k2_ref.dtype)
    k2 = k2_ref[...]
    sh2 = sh2_ref[...]
    for j in range(joints_per_group):                 # small static unroll
        hj = h[:, j * wo1p:(j + 1) * wo1p]            # 128-aligned lane slice
        yj = jnp.dot(hj, k2, preferred_element_type=jnp.float32)
        o_ref[:, j * o2p:(j + 1) * o2p] = (yj + sh2).astype(o_ref.dtype)


# ----------------------------------------------------------------------------
# MS_G3D forward (Pallas path) — wrapper accepts/returns PyTorch NCHW layout
# ----------------------------------------------------------------------------
def ms_g3d_pallas(x, p, cfg, *, compute_dtype=jnp.float32, block_rows_cap=1024,
                  channels_last_out=False):
    N, C, T, V = x.shape
    W = cfg["window_size"]
    S = cfg["num_scales"]

    # in1x1 is Identity (embed_factor == 1).  Unfold stays as XLA glue (TODO above).
    x_flat, Tw = unfold_to_rows(x, W, cfg["window_stride"], cfg["window_dilation"])
    NT = N * Tw
    Vw = W * V

    O1 = p["W1"].shape[0]
    O2 = p["W3"].shape[0]
    D_in = Vw * C
    WO1 = W * O1

    # 128-lane padding everywhere (dense stores, aligned MXU tiles, aligned slices).
    D_in_p = _round_up(D_in, 128)
    WO1p = _round_up(WO1, 128)
    O2p = _round_up(O2, 128)

    # ---- Stage-1 operator: fold A-scales, 1x1 conv, conv bias, BN1 (eval) ----
    # K1[(u_src,c), (v_dst, w_dst, o1)] = sum_s A_s[u_dst, u_src] * W1[o1, s*C+c] * bn1_scale[o1]
    A3 = (p["A_scales"] + p["A_res"]).reshape(S, Vw, Vw)            # A3[s, dst, src]
    W1r = p["W1"].reshape(O1, S, C)                                 # W1r[o, s, c]
    K1_core = jnp.einsum("sdu,osc->ucdo", A3, W1r)                  # (u, c, d, o)
    sc1 = p["bn1_gamma"] / jnp.sqrt(p["bn1_var"] + EPS)             # (O1,)
    sh1_o = p["b1"] * sc1 + p["bn1_beta"] - p["bn1_mean"] * sc1
    K1_core = K1_core * sc1[None, None, None, :]
    # Reorder destination axis d = w_dst*V + v_dst -> joint-major (v_dst, w_dst, o1)
    K1_5 = K1_core.reshape(Vw, C, W, V, O1)
    K1_5 = jnp.transpose(K1_5, (0, 1, 3, 2, 4))                     # (u, c, v, w, o)
    K1_j = K1_5.reshape(D_in, V, WO1)

    # ---- Stage-2 operator: (1,W,1) out_conv + BN2, shared across joints ----
    W3k = p["W3"][:, :, 0, :, 0]                                    # (O2, O1, W)
    K2 = jnp.transpose(W3k, (2, 1, 0)).reshape(WO1, O2)             # rows (w, o1)
    sc2 = p["bn2_gamma"] / jnp.sqrt(p["bn2_var"] + EPS)
    sh2_o = p["b3"] * sc2 + p["bn2_beta"] - p["bn2_mean"] * sc2
    K2 = K2 * sc2[None, :]

    # ---- Choose joint grouping / row block from device VMEM ----
    vmem_cap = _vmem_capacity_bytes()
    w_itemsize = jnp.dtype(compute_dtype).itemsize
    x_itemsize = jnp.dtype(compute_dtype).itemsize
    row_align = 16 if w_itemsize < 4 else 8
    G, NG = _choose_joint_group(V, D_in_p, WO1p, w_itemsize, vmem_cap)
    Vp = NG * G
    R, vmem_limit = _choose_row_block(NT, D_in_p, G, WO1p, O2p, w_itemsize,
                                      x_itemsize, row_align, block_rows_cap, vmem_cap)
    NT_p = _round_up(NT, R)

    # ---- Zero-padded, lane-aligned operands ----
    x_p = jnp.pad(x_flat, ((0, NT_p - NT), (0, D_in_p - D_in))).astype(compute_dtype)

    K1p = jnp.zeros((D_in_p, Vp, WO1p), jnp.float32)
    K1p = K1p.at[:D_in, :V, :WO1].set(K1_j).reshape(D_in_p, Vp * WO1p).astype(compute_dtype)

    sh1p = jnp.zeros((Vp, WO1p), jnp.float32)
    sh1p = sh1p.at[:V, :WO1].set(jnp.broadcast_to(jnp.tile(sh1_o, W), (V, WO1)))
    sh1p = sh1p.reshape(1, Vp * WO1p)

    K2p = jnp.zeros((WO1p, O2p), jnp.float32).at[:WO1, :O2].set(K2).astype(compute_dtype)
    sh2p = jnp.zeros((1, O2p), jnp.float32).at[0, :O2].set(sh2_o)

    kernel_fn = functools.partial(ms_g3d_fused_kernel,
                                  joints_per_group=G, wo1p=WO1p, o2p=O2p)
    grid = (NT_p // R, NG)

    def build_and_run(single_buffer_consts):
        def const_spec(shape):
            kwargs = {}
            if single_buffer_consts:
                # Constant-index operands: single-buffer to halve their VMEM footprint.
                kwargs["pipeline_mode"] = pl.Buffered(1)
            return pl.BlockSpec(shape, lambda i, g: (0, 0), **kwargs)

        return pl.pallas_call(
            kernel_fn,
            out_shape=jax.ShapeDtypeStruct((NT_p, Vp * O2p), jnp.float32),
            grid=grid,
            in_specs=[
                pl.BlockSpec((R, D_in_p), lambda i, g: (i, 0)),          # X rows (fetched once per i)
                pl.BlockSpec((D_in_p, G * WO1p), lambda i, g: (0, g)),   # K1 joint-group column block
                pl.BlockSpec((1, G * WO1p), lambda i, g: (0, g)),        # folded bias+BN1 shift
                const_spec((WO1p, O2p)),                                 # shared out_conv operator
                const_spec((1, O2p)),                                    # folded bias+BN2 shift
            ],
            out_specs=pl.BlockSpec((R, G * O2p), lambda i, g: (i, g)),   # lane-dense output block
            compiler_params=pltpu.CompilerParams(
                dimension_semantics=("parallel", "arbitrary"),           # rows megacore-shardable
                vmem_limit_bytes=vmem_limit),
        )(x_p, K1p, sh1p, K2p, sh2p)

    try:
        y_flat = build_and_run(True)
    except Exception:
        # Fallback if pipeline_mode=pl.Buffered(1) is unsupported by this jax build.
        y_flat = build_and_run(False)

    y = y_flat[:NT].reshape(N, Tw, Vp, O2p)[:, :, :V, :O2]          # drop lane/joint padding
    if channels_last_out:
        return y                                                     # (N, Tw, V, O2)
    return jnp.transpose(y, (0, 3, 1, 2))                            # NCHW (N, O2, Tw, V)


# ----------------------------------------------------------------------------
# Pure-JAX reference (mirrors the PyTorch forward exactly, NCHW)
# ----------------------------------------------------------------------------
def ms_g3d_reference(x, p, cfg):
    N, C, T, V = x.shape
    W = cfg["window_size"]
    S = cfg["num_scales"]

    x_unf = unfold_temporal_windows(x, W, cfg["window_stride"], cfg["window_dilation"])
    Tw = x_unf.shape[2]
    Vw = W * V

    A = p["A_scales"] + p["A_res"]                              # (S*Vw, Vw)
    agg = jnp.einsum("vu,nctu->nctv", A, x_unf)                 # (N, C, Tw, S*Vw)
    agg = agg.reshape(N, C, Tw, S, Vw).transpose(0, 3, 1, 2, 4).reshape(N, S * C, Tw, Vw)

    h = jnp.einsum("oc,nctv->notv", p["W1"], agg) + p["b1"][None, :, None, None]
    h = (h - p["bn1_mean"][None, :, None, None]) / jnp.sqrt(p["bn1_var"][None, :, None, None] + EPS) \
        * p["bn1_gamma"][None, :, None, None] + p["bn1_beta"][None, :, None, None]
    h = jnp.maximum(h, 0.0)

    O1 = h.shape[1]
    h5 = h.reshape(N, O1, Tw, W, V)
    y = jnp.einsum("oiw,nitwv->notv", p["W3"][:, :, 0, :, 0], h5) + p["b3"][None, :, None, None]
    y = (y - p["bn2_mean"][None, :, None, None]) / jnp.sqrt(p["bn2_var"][None, :, None, None] + EPS) \
        * p["bn2_gamma"][None, :, None, None] + p["bn2_beta"][None, :, None, None]
    return y


# ----------------------------------------------------------------------------
# Main
# ----------------------------------------------------------------------------
if __name__ == "__main__":
    # Module configuration (in_channels=3 => embed_channels_out = out_channels)
    N, C_in, T, V = 2, 3, 16, 5
    out_channels = 8
    num_scales = 2
    window_size, window_stride, window_dilation = 3, 1, 1
    Vw = window_size * V
    O1 = out_channels          # embed_channels_out
    O2 = out_channels

    cfg = dict(window_size=window_size, window_stride=window_stride,
               window_dilation=window_dilation, num_scales=num_scales)

    # Deterministic small skeleton graph (5 joints, chain + one cross edge)
    A_binary = np.zeros((V, V), dtype=np.float32)
    for (i, j) in [(0, 1), (1, 2), (2, 3), (3, 4), (1, 3)]:
        A_binary[i, j] = 1.0
        A_binary[j, i] = 1.0

    A_scales_np = build_A_scales(A_binary, num_scales, window_size)   # (S*Vw, Vw)

    key = jax.random.PRNGKey(0)
    ks = jax.random.split(key, 16)
    p = {
        "A_scales": jnp.asarray(A_scales_np, jnp.float32),
        "A_res": jax.random.uniform(ks[0], (num_scales * Vw, Vw), jnp.float32, -1e-6, 1e-6),
        # MLP (1x1 conv num_scales*C_in -> O1) + BN, ReLU
        "W1": 0.2 * jax.random.normal(ks[1], (O1, num_scales * C_in), jnp.float32),
        "b1": 0.1 * jax.random.normal(ks[2], (O1,), jnp.float32),
        "bn1_gamma": 1.0 + 0.1 * jax.random.normal(ks[3], (O1,), jnp.float32),
        "bn1_beta": 0.1 * jax.random.normal(ks[4], (O1,), jnp.float32),
        "bn1_mean": 0.1 * jax.random.normal(ks[5], (O1,), jnp.float32),
        "bn1_var": jax.random.uniform(ks[6], (O1,), jnp.float32, 0.5, 1.5),
        # out_conv Conv3d(O1 -> O2, kernel=(1, window_size, 1)) + out_bn
        "W3": 0.2 * jax.random.normal(ks[7], (O2, O1, 1, window_size, 1), jnp.float32),
        "b3": 0.1 * jax.random.normal(ks[8], (O2,), jnp.float32),
        "bn2_gamma": 1.0 + 0.1 * jax.random.normal(ks[9], (O2,), jnp.float32),
        "bn2_beta": 0.1 * jax.random.normal(ks[10], (O2,), jnp.float32),
        "bn2_mean": 0.1 * jax.random.normal(ks[11], (O2,), jnp.float32),
        "bn2_var": jax.random.uniform(ks[12], (O2,), jnp.float32, 0.5, 1.5),
    }

    x = jax.random.normal(ks[13], (N, C_in, T, V), jnp.float32)   # NCHW input, like PyTorch

    out_pallas = jax.block_until_ready(ms_g3d_pallas(x, p, cfg))
    out_ref = jax.block_until_ready(ms_g3d_reference(x, p, cfg))

    assert out_pallas.shape == (N, out_channels, T, V), out_pallas.shape
    np.testing.assert_allclose(np.asarray(out_pallas), np.asarray(out_ref),
                               rtol=1e-4, atol=1e-4)
    print("KERNEL_OK")
</pallas_src>

<mosaic_0001>
module attributes {stable_mosaic.version = 11 : i64} {
  func.func @ms_g3d_fused_kernel(%arg0: i32, %arg1: i32, %arg2: memref<32x128xf32, #tpu.memory_space<vmem>>, %arg3: memref<128x640xf32, #tpu.memory_space<vmem>>, %arg4: memref<1x640xf32, #tpu.memory_space<vmem>>, %arg5: memref<128x128xf32, #tpu.memory_space<vmem>>, %arg6: memref<1x128xf32, #tpu.memory_space<vmem>>, %arg7: memref<32x640xf32, #tpu.memory_space<vmem>>) attributes {dimension_semantics = [#tpu.dimension_semantics<parallel>, #tpu.dimension_semantics<arbitrary>], iteration_bounds = array<i64: 1, 1>, scalar_prefetch = 0 : i64, scratch_operands = 0 : i64, tpu.core_type = #tpu.core_type<tc>, window_params = [{transform_indices = @transform_0, window_bounds = array<i64: 32, 128>}, {transform_indices = @transform_1, window_bounds = array<i64: 128, 640>}, {transform_indices = @transform_2, window_bounds = array<i64: 1, 640>}, {pipeline_mode = #tpu.pipeline_mode<synchronous>, transform_indices = @transform_3, window_bounds = array<i64: 128, 128>}, {pipeline_mode = #tpu.pipeline_mode<synchronous>, transform_indices = @transform_4, window_bounds = array<i64: 1, 128>}, {transform_indices = @transform_5, window_bounds = array<i64: 32, 640>}]} {
    %c0 = arith.constant 0 : index
    %c0_0 = arith.constant 0 : index
    %0 = vector.load %arg2[%c0, %c0_0] : memref<32x128xf32, #tpu.memory_space<vmem>>, vector<32x128xf32>
    %c0_1 = arith.constant 0 : index
    %c0_2 = arith.constant 0 : index
    %1 = vector.load %arg3[%c0_1, %c0_2] : memref<128x640xf32, #tpu.memory_space<vmem>>, vector<128x640xf32>
    %cst = arith.constant dense<0.000000e+00> : vector<32x640xf32>
    %2 = tpu.matmul %0, %1, %cst {dimension_numbers = #tpu.dot_dimension_numbers<[1], [0], [0], [1], [0, 0, 1, 1], [], []>} : vector<32x128xf32>, vector<128x640xf32>, vector<32x640xf32> -> vector<32x640xf32>
    %c0_3 = arith.constant 0 : index
    %c0_4 = arith.constant 0 : index
    %3 = vector.load %arg4[%c0_3, %c0_4] : memref<1x640xf32, #tpu.memory_space<vmem>>, vector<1x640xf32>
    %4 = vector.broadcast %3 : vector<1x640xf32> to vector<32x640xf32>
    %5 = arith.addf %2, %4 : vector<32x640xf32>
    %cst_5 = arith.constant 0.000000e+00 : f32
    %6 = vector.broadcast %cst_5 : f32 to vector<32x640xf32>
    %7 = arith.maximumf %5, %6 : vector<32x640xf32>
    %c0_6 = arith.constant 0 : index
    %c0_7 = arith.constant 0 : index
    %8 = vector.load %arg5[%c0_6, %c0_7] : memref<128x128xf32, #tpu.memory_space<vmem>>, vector<128x128xf32>
    %c0_8 = arith.constant 0 : index
    %c0_9 = arith.constant 0 : index
    %9 = vector.load %arg6[%c0_8, %c0_9] : memref<1x128xf32, #tpu.memory_space<vmem>>, vector<1x128xf32>
    %10 = vector.extract_strided_slice %7 {offsets = [0, 0], sizes = [32, 128], strides = [1, 1]} : vector<32x640xf32> to vector<32x128xf32>
    %cst_10 = arith.constant dense<0.000000e+00> : vector<32x128xf32>
    %11 = tpu.matmul %10, %8, %cst_10 {dimension_numbers = #tpu.dot_dimension_numbers<[1], [0], [0], [1], [0, 0, 1, 1], [], []>} : vector<32x128xf32>, vector<128x128xf32>, vector<32x128xf32> -> vector<32x128xf32>
    %12 = vector.broadcast %9 : vector<1x128xf32> to vector<32x128xf32>
    %13 = arith.addf %11, %12 : vector<32x128xf32>
    %c0_11 = arith.constant 0 : index
    %c0_12 = arith.constant 0 : index
    %14 = vector.load %arg7[%c0_11, %c0_12] : memref<32x640xf32, #tpu.memory_space<vmem>>, vector<32x128xf32>
    tpu.vector_store %arg7[%c0_11, %c0_12], %13 {strides = array<i32>} : memref<32x640xf32, #tpu.memory_space<vmem>>, vector<32x128xf32>,
    %15 = vector.extract_strided_slice %7 {offsets = [0, 128], sizes = [32, 128], strides = [1, 1]} : vector<32x640xf32> to vector<32x128xf32>
    %cst_13 = arith.constant dense<0.000000e+00> : vector<32x128xf32>
    %16 = tpu.matmul %15, %8, %cst_13 {dimension_numbers = #tpu.dot_dimension_numbers<[1], [0], [0], [1], [0, 0, 1, 1], [], []>} : vector<32x128xf32>, vector<128x128xf32>, vector<32x128xf32> -> vector<32x128xf32>
    %17 = vector.broadcast %9 : vector<1x128xf32> to vector<32x128xf32>
    %18 = arith.addf %16, %17 : vector<32x128xf32>
    %c0_14 = arith.constant 0 : index
    %c128 = arith.constant 128 : index
    %19 = vector.load %arg7[%c0_14, %c128] : memref<32x640xf32, #tpu.memory_space<vmem>>, vector<32x128xf32>
    tpu.vector_store %arg7[%c0_14, %c128], %18 {strides = array<i32>} : memref<32x640xf32, #tpu.memory_space<vmem>>, vector<32x128xf32>,
    %20 = vector.extract_strided_slice %7 {offsets = [0, 256], sizes = [32, 128], strides = [1, 1]} : vector<32x640xf32> to vector<32x128xf32>
    %cst_15 = arith.constant dense<0.000000e+00> : vector<32x128xf32>
    %21 = tpu.matmul %20, %8, %cst_15 {dimension_numbers = #tpu.dot_dimension_numbers<[1], [0], [0], [1], [0, 0, 1, 1], [], []>} : vector<32x128xf32>, vector<128x128xf32>, vector<32x128xf32> -> vector<32x128xf32>
    %22 = vector.broadcast %9 : vector<1x128xf32> to vector<32x128xf32>
    %23 = arith.addf %21, %22 : vector<32x128xf32>
    %c0_16 = arith.constant 0 : index
    %c256 = arith.constant 256 : index
    %24 = vector.load %arg7[%c0_16, %c256] : memref<32x640xf32, #tpu.memory_space<vmem>>, vector<32x128xf32>
    tpu.vector_store %arg7[%c0_16, %c256], %23 {strides = array<i32>} : memref<32x640xf32, #tpu.memory_space<vmem>>, vector<32x128xf32>,
    %25 = vector.extract_strided_slice %7 {offsets = [0, 384], sizes = [32, 128], strides = [1, 1]} : vector<32x640xf32> to vector<32x128xf32>
    %cst_17 = arith.constant dense<0.000000e+00> : vector<32x128xf32>
    %26 = tpu.matmul %25, %8, %cst_17 {dimension_numbers = #tpu.dot_dimension_numbers<[1], [0], [0], [1], [0, 0, 1, 1], [], []>} : vector<32x128xf32>, vector<128x128xf32>, vector<32x128xf32> -> vector<32x128xf32>
    %27 = vector.broadcast %9 : vector<1x128xf32> to vector<32x128xf32>
    %28 = arith.addf %26, %27 : vector<32x128xf32>
    %c0_18 = arith.constant 0 : index
    %c384 = arith.constant 384 : index
    %29 = vector.load %arg7[%c0_18, %c384] : memref<32x640xf32, #tpu.memory_space<vmem>>, vector<32x128xf32>
    tpu.vector_store %arg7[%c0_18, %c384], %28 {strides = array<i32>} : memref<32x640xf32, #tpu.memory_space<vmem>>, vector<32x128xf32>,
    %30 = vector.extract_strided_slice %7 {offsets = [0, 512], sizes = [32, 128], strides = [1, 1]} : vector<32x640xf32> to vector<32x128xf32>
    %cst_19 = arith.constant dense<0.000000e+00> : vector<32x128xf32>
    %31 = tpu.matmul %30, %8, %cst_19 {dimension_numbers = #tpu.dot_dimension_numbers<[1], [0], [0], [1], [0, 0, 1, 1], [], []>} : vector<32x128xf32>, vector<128x128xf32>, vector<32x128xf32> -> vector<32x128xf32>
    %32 = vector.broadcast %9 : vector<1x128xf32> to vector<32x128xf32>
    %33 = arith.addf %31, %32 : vector<32x128xf32>
    %c0_20 = arith.constant 0 : index
    %c512 = arith.constant 512 : index
    %34 = vector.load %arg7[%c0_20, %c512] : memref<32x640xf32, #tpu.memory_space<vmem>>, vector<32x128xf32>
    tpu.vector_store %arg7[%c0_20, %c512], %33 {strides = array<i32>} : memref<32x640xf32, #tpu.memory_space<vmem>>, vector<32x128xf32>,
    return
  }
  func.func @transform_0(%arg0: i32, %arg1: i32) -> (i32, i32) {
    %c0_i32 = arith.constant 0 : i32
    %c0_i32_0 = arith.constant 0 : i32
    return %arg0, %c0_i32 : i32, i32
  }
  func.func @transform_1(%arg0: i32, %arg1: i32) -> (i32, i32) {
    %c0_i32 = arith.constant 0 : i32
    %c0_i32_0 = arith.constant 0 : i32
    return %c0_i32, %arg1 : i32, i32
  }
  func.func @transform_2(%arg0: i32, %arg1: i32) -> (i32, i32) {
    %c0_i32 = arith.constant 0 : i32
    %c0_i32_0 = arith.constant 0 : i32
    return %c0_i32, %arg1 : i32, i32
  }
  func.func @transform_3(%arg0: i32, %arg1: i32) -> (i32, i32) {
    %c0_i32 = arith.constant 0 : i32
    %c0_i32_0 = arith.constant 0 : i32
    %c0_i32_1 = arith.constant 0 : i32
    return %c0_i32, %c0_i32_0 : i32, i32
  }
  func.func @transform_4(%arg0: i32, %arg1: i32) -> (i32, i32) {
    %c0_i32 = arith.constant 0 : i32
    %c0_i32_0 = arith.constant 0 : i32
    %c0_i32_1 = arith.constant 0 : i32
    return %c0_i32, %c0_i32_0 : i32, i32
  }
  func.func @transform_5(%arg0: i32, %arg1: i32) -> (i32, i32) {
    %c0_i32 = arith.constant 0 : i32
    return %arg0, %arg1 : i32, i32
  }
}

module attributes {stable_mosaic.version = 11 : i64} {
  func.func @ms_g3d_fused_kernel(%arg0: i32, %arg1: i32, %arg2: memref<32x128xf32, #tpu.memory_space<vmem>>, %arg3: memref<128x640xf32, #tpu.memory_space<vmem>>, %arg4: memref<1x640xf32, #tpu.memory_space<vmem>>, %arg5: memref<128x128xf32, #tpu.memory_space<vmem>>, %arg6: memref<1x128xf32, #tpu.memory_space<vmem>>, %arg7: memref<32x640xf32, #tpu.memory_space<vmem>>) attributes {dimension_semantics = [#tpu.dimension_semantics<parallel>, #tpu.dimension_semantics<arbitrary>], iteration_bounds = array<i64: 1, 1>, scalar_prefetch = 0 : i64, scratch_operands = 0 : i64, tpu.core_type = #tpu.core_type<tc>, window_params = [{transform_indices = @transform_0, window_bounds = array<i64: 32, 128>}, {transform_indices = @transform_1, window_bounds = array<i64: 128, 640>}, {transform_indices = @transform_2, window_bounds = array<i64: 1, 640>}, {pipeline_mode = #tpu.pipeline_mode<synchronous>, transform_indices = @transform_3, window_bounds = array<i64: 128, 128>}, {pipeline_mode = #tpu.pipeline_mode<synchronous>, transform_indices = @transform_4, window_bounds = array<i64: 1, 128>}, {transform_indices = @transform_5, window_bounds = array<i64: 32, 640>}]} {
    %c0 = arith.constant 0 : index
    %c0_0 = arith.constant 0 : index
    %0 = vector.load %arg2[%c0, %c0_0] : memref<32x128xf32, #tpu.memory_space<vmem>>, vector<32x128xf32>
    %c0_1 = arith.constant 0 : index
    %c0_2 = arith.constant 0 : index
    %1 = vector.load %arg3[%c0_1, %c0_2] : memref<128x640xf32, #tpu.memory_space<vmem>>, vector<128x640xf32>
    %cst = arith.constant dense<0.000000e+00> : vector<32x640xf32>
    %2 = tpu.matmul %0, %1, %cst {dimension_numbers = #tpu.dot_dimension_numbers<[1], [0], [0], [1], [0, 0, 1, 1], [], []>} : vector<32x128xf32>, vector<128x640xf32>, vector<32x640xf32> -> vector<32x640xf32>
    %c0_3 = arith.constant 0 : index
    %c0_4 = arith.constant 0 : index
    %3 = vector.load %arg4[%c0_3, %c0_4] : memref<1x640xf32, #tpu.memory_space<vmem>>, vector<1x640xf32>
    %4 = vector.broadcast %3 : vector<1x640xf32> to vector<32x640xf32>
    %5 = arith.addf %2, %4 : vector<32x640xf32>
    %cst_5 = arith.constant 0.000000e+00 : f32
    %6 = vector.broadcast %cst_5 : f32 to vector<32x640xf32>
    %7 = arith.maximumf %5, %6 : vector<32x640xf32>
    %c0_6 = arith.constant 0 : index
    %c0_7 = arith.constant 0 : index
    %8 = vector.load %arg5[%c0_6, %c0_7] : memref<128x128xf32, #tpu.memory_space<vmem>>, vector<128x128xf32>
    %c0_8 = arith.constant 0 : index
    %c0_9 = arith.constant 0 : index
    %9 = vector.load %arg6[%c0_8, %c0_9] : memref<1x128xf32, #tpu.memory_space<vmem>>, vector<1x128xf32>
    %10 = vector.extract_strided_slice %7 {offsets = [0, 0], sizes = [32, 128], strides = [1, 1]} : vector<32x640xf32> to vector<32x128xf32>
    %cst_10 = arith.constant dense<0.000000e+00> : vector<32x128xf32>
    %11 = tpu.matmul %10, %8, %cst_10 {dimension_numbers = #tpu.dot_dimension_numbers<[1], [0], [0], [1], [0, 0, 1, 1], [], []>} : vector<32x128xf32>, vector<128x128xf32>, vector<32x128xf32> -> vector<32x128xf32>
    %12 = vector.broadcast %9 : vector<1x128xf32> to vector<32x128xf32>
    %13 = arith.addf %11, %12 : vector<32x128xf32>
    %c0_11 = arith.constant 0 : index
    %c0_12 = arith.constant 0 : index
    %14 = vector.load %arg7[%c0_11, %c0_12] : memref<32x640xf32, #tpu.memory_space<vmem>>, vector<32x128xf32>
    tpu.vector_store %arg7[%c0_11, %c0_12], %13 {strides = array<i32>} : memref<32x640xf32, #tpu.memory_space<vmem>>, vector<32x128xf32>,
    %15 = vector.extract_strided_slice %7 {offsets = [0, 128], sizes = [32, 128], strides = [1, 1]} : vector<32x640xf32> to vector<32x128xf32>
    %cst_13 = arith.constant dense<0.000000e+00> : vector<32x128xf32>
    %16 = tpu.matmul %15, %8, %cst_13 {dimension_numbers = #tpu.dot_dimension_numbers<[1], [0], [0], [1], [0, 0, 1, 1], [], []>} : vector<32x128xf32>, vector<128x128xf32>, vector<32x128xf32> -> vector<32x128xf32>
    %17 = vector.broadcast %9 : vector<1x128xf32> to vector<32x128xf32>
    %18 = arith.addf %16, %17 : vector<32x128xf32>
    %c0_14 = arith.constant 0 : index
    %c128 = arith.constant 128 : index
    %19 = vector.load %arg7[%c0_14, %c128] : memref<32x640xf32, #tpu.memory_space<vmem>>, vector<32x128xf32>
    tpu.vector_store %arg7[%c0_14, %c128], %18 {strides = array<i32>} : memref<32x640xf32, #tpu.memory_space<vmem>>, vector<32x128xf32>,
    %20 = vector.extract_strided_slice %7 {offsets = [0, 256], sizes = [32, 128], strides = [1, 1]} : vector<32x640xf32> to vector<32x128xf32>
    %cst_15 = arith.constant dense<0.000000e+00> : vector<32x128xf32>
    %21 = tpu.matmul %20, %8, %cst_15 {dimension_numbers = #tpu.dot_dimension_numbers<[1], [0], [0], [1], [0, 0, 1, 1], [], []>} : vector<32x128xf32>, vector<128x128xf32>, vector<32x128xf32> -> vector<32x128xf32>
    %22 = vector.broadcast %9 : vector<1x128xf32> to vector<32x128xf32>
    %23 = arith.addf %21, %22 : vector<32x128xf32>
    %c0_16 = arith.constant 0 : index
    %c256 = arith.constant 256 : index
    %24 = vector.load %arg7[%c0_16, %c256] : memref<32x640xf32, #tpu.memory_space<vmem>>, vector<32x128xf32>
    tpu.vector_store %arg7[%c0_16, %c256], %23 {strides = array<i32>} : memref<32x640xf32, #tpu.memory_space<vmem>>, vector<32x128xf32>,
    %25 = vector.extract_strided_slice %7 {offsets = [0, 384], sizes = [32, 128], strides = [1, 1]} : vector<32x640xf32> to vector<32x128xf32>
    %cst_17 = arith.constant dense<0.000000e+00> : vector<32x128xf32>
    %26 = tpu.matmul %25, %8, %cst_17 {dimension_numbers = #tpu.dot_dimension_numbers<[1], [0], [0], [1], [0, 0, 1, 1], [], []>} : vector<32x128xf32>, vector<128x128xf32>, vector<32x128xf32> -> vector<32x128xf32>
    %27 = vector.broadcast %9 : vector<1x128xf32> to vector<32x128xf32>
    %28 = arith.addf %26, %27 : vector<32x128xf32>
    %c0_18 = arith.constant 0 : index
    %c384 = arith.constant 384 : index
    %29 = vector.load %arg7[%c0_18, %c384] : memref<32x640xf32, #tpu.memory_space<vmem>>, vector<32x128xf32>
    tpu.vector_store %arg7[%c0_18, %c384], %28 {strides = array<i32>} : memref<32x640xf32, #tpu.memory_space<vmem>>, vector<32x128xf32>,
    %30 = vector.extract_strided_slice %7 {offsets = [0, 512], sizes = [32, 128], strides = [1, 1]} : vector<32x640xf32> to vector<32x128xf32>
    %cst_19 = arith.constant dense<0.000000e+00> : vector<32x128xf32>
    %31 = tpu.matmul %30, %8, %cst_19 {dimension_numbers = #tpu.dot_dimension_numbers<[1], [0], [0], [1], [0, 0, 1, 1], [], []>} : vector<32x128xf32>, vector<128x128xf32>, vector<32x128xf32> -> vector<32x128xf32>
    %32 = vector.broadcast %9 : vector<1x128xf32> to vector<32x128xf32>
    %33 = arith.addf %31, %32 : vector<32x128xf32>
    %c0_20 = arith.constant 0 : index
    %c512 = arith.constant 512 : index
    %34 = vector.load %arg7[%c0_20, %c512] : memref<32x640xf32, #tpu.memory_space<vmem>>, vector<32x128xf32>
    tpu.vector_store %arg7[%c0_20, %c512], %33 {strides = array<i32>} : memref<32x640xf32, #tpu.memory_space<vmem>>, vector<32x128xf32>,
    return
  }
  func.func @transform_0(%arg0: i32, %arg1: i32) -> (i32, i32) {
    %c0_i32 = arith.constant 0 : i32
    %c0_i32_0 = arith.constant 0 : i32
    return %arg0, %c0_i32 : i32, i32
  }
  func.func @transform_1(%arg0: i32, %arg1: i32) -> (i32, i32) {
    %c0_i32 = arith.constant 0 : i32
    %c0_i32_0 = arith.constant 0 : i32
    return %c0_i32, %arg1 : i32, i32
  }
  func.func @transform_2(%arg0: i32, %arg1: i32) -> (i32, i32) {
    %c0_i32 = arith.constant 0 : i32
    %c0_i32_0 = arith.constant 0 : i32
    return %c0_i32, %arg1 : i32, i32
  }
  func.func @transform_3(%arg0: i32, %arg1: i32) -> (i32, i32) {
    %c0_i32 = arith.constant 0 : i32
    %c0_i32_0 = arith.constant 0 : i32
    %c0_i32_1 = arith.constant 0 : i32
    return %c0_i32, %c0_i32_0 : i32, i32
  }
  func.func @transform_4(%arg0: i32, %arg1: i32) -> (i32, i32) {
    %c0_i32 = arith.constant 0 : i32
    %c0_i32_0 = arith.constant 0 : i32
    %c0_i32_1 = arith.constant 0 : i32
    return %c0_i32, %c0_i32_0 : i32, i32
  }
  func.func @transform_5(%arg0: i32, %arg1: i32) -> (i32, i32) {
    %c0_i32 = arith.constant 0 : i32
    return %arg0, %arg1 : i32, i32
  }
}

</mosaic_0001>

<llo_original>
// kernel: tpu_custom_call.1
$region0: #{tpu_custom_call.1}
  #allocation0 [shape = 'u32[]', space=smem, size = 0x4, offset = 0x4, fixed_abs, tag = 'smem constant byte address 0x4 - core index']
  #allocation1 [shape = 'u32[144,128]{1,0:T(1,128)}', space=vmem, size = 0x12000, scoped, tag = 'internal scratch']
  %s0 = inlined_call_operand.hbm [shape: f32[32,128], index: 0, kind: input, shape index: {}]
  %s1 = inlined_call_operand.hbm [shape: f32[128,640], index: 1, kind: input, shape index: {}]
  %s2 = inlined_call_operand.vmem [shape: f32[1,640], index: 2, kind: input, shape index: {}]
  %s3 = inlined_call_operand.hbm [shape: f32[128,128], index: 3, kind: input, shape index: {}]
  %s4 = inlined_call_operand.vmem [shape: f32[1,128], index: 4, kind: input, shape index: {}]
  %s5 = inlined_call_operand.hbm [shape: f32[32,640], index: 5, kind: output, shape index: {}]
  %s6 = sld [smem:[#allocation0]]
  $region42: #{tpu_custom_call.1} parent=0
    _
  %s8 = ssub.s32 1, %s6
  %s9 = scalar_select 0, %s8, %s6
  $region1: #{tpu_custom_call.1} parent=0
    #allocation2 [shape = 'u8[16384]{0}', space=vmem, size = 0x4000, scoped, tag = 'input window, operand 0, single buffered']
    #allocation3 [shape = 's32[1]{0}', space=sflag, size = 0x4, scoped, tag = 'scoped memory for tpu_custom_call.1']
    #allocation4 [shape = 's32[1]{0}', space=sflag, size = 0x4, scoped, tag = 'scoped memory for tpu_custom_call.1']
    #allocation5 [shape = 'u8[327680]{0}', space=vmem, size = 0x50000, scoped, tag = 'input window, operand 1, single buffered']
    #allocation6 [shape = 's32[1]{0}', space=sflag, size = 0x4, scoped, tag = 'scoped memory for tpu_custom_call.1']
    #allocation7 [shape = 'u8[65536]{0}', space=vmem, size = 0x10000, scoped, tag = 'input window, operand 3, single buffered']
    #allocation8 [shape = 'u8[81920]{0}', space=vmem, size = 0x14000, scoped, tag = 'output window, operand 0, single buffered']
    %10 = vsyncpa [#allocation3], 0
    %11 = vsyncpa [#allocation6], 0
    %12 = vsyncpa [#allocation4], 0
    // Predicated region
    $region2: #{tpu_custom_call.1} parent=1 // pred_check
      _
    $region3: #{tpu_custom_call.1} parent=1 // pred_check_branch
      %14 = sbr.rel (0) target = $region5
    $region4: #{tpu_custom_call.1} parent=1 // pred_region
      %s16 = ssub.s32 512, 512
      %17 = vsyncadd [#allocation3], %s16
      %s18 = sshll.u32 [#allocation2], 4
      %s19 = int_to_ptr.vmem [resolvable:$true] %s18
      %24 = dma.hbm_to_vmem [thread:$0]  %s0, 512, %s19, [#allocation3], 128, 128, 8
    $region5: #{tpu_custom_call.1} parent=1 // pred_fallthru
      _
    // Predicated region
    $region6: #{tpu_custom_call.1} parent=1 // pred_check
      _
    $region7: #{tpu_custom_call.1} parent=1 // pred_check_branch
      %26 = sbr.rel (0) target = $region9
    $region8: #{tpu_custom_call.1} parent=1 // pred_region
      %s28 = ssub.s32 10240, 10240
      %29 = vsyncadd [#allocation6], %s28
      %s30 = sshll.u32 [#allocation5], 4
      %s31 = int_to_ptr.vmem [resolvable:$true] %s30
      %36 = dma.hbm_to_vmem [thread:$0]  %s1, 10240, %s31, [#allocation6], 640, 640, 40
    $region9: #{tpu_custom_call.1} parent=1 // pred_fallthru
      _
    // Predicated region
    $region10: #{tpu_custom_call.1} parent=1 // pred_check
      _
    $region11: #{tpu_custom_call.1} parent=1 // pred_check_branch
      %38 = sbr.rel (0) target = $region13
    $region12: #{tpu_custom_call.1} parent=1 // pred_region
      _
    $region13: #{tpu_custom_call.1} parent=1 // pred_fallthru
      _
    // Predicated region
    $region14: #{tpu_custom_call.1} parent=1 // pred_check
      _
    $region15: #{tpu_custom_call.1} parent=1 // pred_check_branch
      %40 = sbr.rel (0) target = $region17
    $region16: #{tpu_custom_call.1} parent=1 // pred_region
      %s42 = ssub.s32 2048, 2048
      %43 = vsyncadd [#allocation6], %s42
      %s44 = sshll.u32 [#allocation7], 4
      %s45 = int_to_ptr.vmem [resolvable:$true] %s44
      %50 = dma.hbm_to_vmem [thread:$0]  %s3, 2048, %s45, [#allocation6], 128, 128, 8
    $region17: #{tpu_custom_call.1} parent=1 // pred_fallthru
      _
    // Predicated region
    $region18: #{tpu_custom_call.1} parent=1 // pred_check
      _
    $region19: #{tpu_custom_call.1} parent=1 // pred_check_branch
      %52 = sbr.rel (0) target = $region21
    $region20: #{tpu_custom_call.1} parent=1 // pred_region
      _
    $region21: #{tpu_custom_call.1} parent=1 // pred_fallthru
      _
    // Predicated region
    $region22: #{tpu_custom_call.1} parent=1 // pred_check
      _
    $region23: #{tpu_custom_call.1} parent=1 // pred_check_branch
      %54 = sbr.rel (0) target = $region25
    $region24: #{tpu_custom_call.1} parent=1 // pred_region
      %55 = dma.done [#allocation3], 512
    $region25: #{tpu_custom_call.1} parent=1 // pred_fallthru
      _
    // Predicated region
    $region26: #{tpu_custom_call.1} parent=1 // pred_check
      _
    $region27: #{tpu_custom_call.1} parent=1 // pred_check_branch
      %57 = sbr.rel (0) target = $region29
    $region28: #{tpu_custom_call.1} parent=1 // pred_region
      %58 = dma.done [#allocation6], 10240
    $region29: #{tpu_custom_call.1} parent=1 // pred_fallthru
      _
    // Predicated region
    $region30: #{tpu_custom_call.1} parent=1 // pred_check
      _
    $region31: #{tpu_custom_call.1} parent=1 // pred_check_branch
      %60 = sbr.rel (0) target = $region33
    $region32: #{tpu_custom_call.1} parent=1 // pred_region
      %61 = dma.done [#allocation6], 2048
    $region33: #{tpu_custom_call.1} parent=1 // pred_fallthru
      _
    %v62 = vld [vmem:[#allocation2] sm:$0xff]
    %v63 = vld [vmem:[#allocation2 + $0x8] sm:$0xff]
    %v64 = vld [vmem:[#allocation2 + $0x10] sm:$0xff]
    %v65 = vld [vmem:[#allocation2 + $0x18] sm:$0xff]
    %v66 = vld [vmem:[#allocation5] sm:$0xff]
    %v67 = vld [vmem:[#allocation5 + $0x8] sm:$0xff]
    %v68 = vld [vmem:[#allocation5 + $0x10] sm:$0xff]
    %v69 = vld [vmem:[#allocation5 + $0x18] sm:$0xff]
    %v70 = vld [vmem:[#allocation5 + $0x20] sm:$0xff]
    %v71 = vld [vmem:[#allocation5 + $0x28] sm:$0xff]
    %v72 = vld [vmem:[#allocation5 + $0x30] sm:$0xff]
    %v73 = vld [vmem:[#allocation5 + $0x38] sm:$0xff]
    %v74 = vld [vmem:[#allocation5 + $0x40] sm:$0xff]
    %v75 = vld [vmem:[#allocation5 + $0x48] sm:$0xff]
    %v76 = vld [vmem:[#allocation5 + $0x50] sm:$0xff]
    %v77 = vld [vmem:[#allocation5 + $0x58] sm:$0xff]
    %v78 = vld [vmem:[#allocation5 + $0x60] sm:$0xff]
    %v79 = vld [vmem:[#allocation5 + $0x68] sm:$0xff]
    %v80 = vld [vmem:[#allocation5 + $0x70] sm:$0xff]
    %v81 = vld [vmem:[#allocation5 + $0x78] sm:$0xff]
    %v82 = vld [vmem:[#allocation5 + $0x80] sm:$0xff]
    %v83 = vld [vmem:[#allocation5 + $0x88] sm:$0xff]
    %v84 = vld [vmem:[#allocation5 + $0x90] sm:$0xff]
    %v85 = vld [vmem:[#allocation5 + $0x98] sm:$0xff]
    %v86 = vld [vmem:[#allocation5 + $0xa0] sm:$0xff]
    %v87 = vld [vmem:[#allocation5 + $0xa8] sm:$0xff]
    %v88 = vld [vmem:[#allocation5 + $0xb0] sm:$0xff]
    %v89 = vld [vmem:[#allocation5 + $0xb8] sm:$0xff]
    %v90 = vld [vmem:[#allocation5 + $0xc0] sm:$0xff]
    %v91 = vld [vmem:[#allocation5 + $0xc8] sm:$0xff]
    %v92 = vld [vmem:[#allocation5 + $0xd0] sm:$0xff]
    %v93 = vld [vmem:[#allocation5 + $0xd8] sm:$0xff]
    %v94 = vld [vmem:[#allocation5 + $0xe0] sm:$0xff]
    %v95 = vld [vmem:[#allocation5 + $0xe8] sm:$0xff]
    %v96 = vld [vmem:[#allocation5 + $0xf0] sm:$0xff]
    %v97 = vld [vmem:[#allocation5 + $0xf8] sm:$0xff]
    %v98 = vld [vmem:[#allocation5 + $0x100] sm:$0xff]
    %v99 = vld [vmem:[#allocation5 + $0x108] sm:$0xff]
    %v100 = vld [vmem:[#allocation5 + $0x110] sm:$0xff]
    %v101 = vld [vmem:[#allocation5 + $0x118] sm:$0xff]
    %v102 = vld [vmem:[#allocation5 + $0x120] sm:$0xff]
    %v103 = vld [vmem:[#allocation5 + $0x128] sm:$0xff]
    %v104 = vld [vmem:[#allocation5 + $0x130] sm:$0xff]
    %v105 = vld [vmem:[#allocation5 + $0x138] sm:$0xff]
    %v106 = vld [vmem:[#allocation5 + $0x140] sm:$0xff]
    %v107 = vld [vmem:[#allocation5 + $0x148] sm:$0xff]
    %v108 = vld [vmem:[#allocation5 + $0x150] sm:$0xff]
    %v109 = vld [vmem:[#allocation5 + $0x158] sm:$0xff]
    %v110 = vld [vmem:[#allocation5 + $0x160] sm:$0xff]
    %v111 = vld [vmem:[#allocation5 + $0x168] sm:$0xff]
    %v112 = vld [vmem:[#allocation5 + $0x170] sm:$0xff]
    %v113 = vld [vmem:[#allocation5 + $0x178] sm:$0xff]
    %v114 = vld [vmem:[#allocation5 + $0x180] sm:$0xff]
    %v115 = vld [vmem:[#allocation5 + $0x188] sm:$0xff]
    %v116 = vld [vmem:[#allocation5 + $0x190] sm:$0xff]
    %v117 = vld [vmem:[#allocation5 + $0x198] sm:$0xff]
    %v118 = vld [vmem:[#allocation5 + $0x1a0] sm:$0xff]
    %v119 = vld [vmem:[#allocation5 + $0x1a8] sm:$0xff]
    %v120 = vld [vmem:[#allocation5 + $0x1b0] sm:$0xff]
    %v121 = vld [vmem:[#allocation5 + $0x1b8] sm:$0xff]
    %v122 = vld [vmem:[#allocation5 + $0x1c0] sm:$0xff]
    %v123 = vld [vmem:[#allocation5 + $0x1c8] sm:$0xff]
    %v124 = vld [vmem:[#allocation5 + $0x1d0] sm:$0xff]
    %v125 = vld [vmem:[#allocation5 + $0x1d8] sm:$0xff]
    %v126 = vld [vmem:[#allocation5 + $0x1e0] sm:$0xff]
    %v127 = vld [vmem:[#allocation5 + $0x1e8] sm:$0xff]
    %v128 = vld [vmem:[#allocation5 + $0x1f0] sm:$0xff]
    %v129 = vld [vmem:[#allocation5 + $0x1f8] sm:$0xff]
    %v130 = vld [vmem:[#allocation5 + $0x200] sm:$0xff]
    %v131 = vld [vmem:[#allocation5 + $0x208] sm:$0xff]
    %v132 = vld [vmem:[#allocation5 + $0x210] sm:$0xff]
    %v133 = vld [vmem:[#allocation5 + $0x218] sm:$0xff]
    %v134 = vld [vmem:[#allocation5 + $0x220] sm:$0xff]
    %v135 = vld [vmem:[#allocation5 + $0x228] sm:$0xff]
    %v136 = vld [vmem:[#allocation5 + $0x230] sm:$0xff]
    %v137 = vld [vmem:[#allocation5 + $0x238] sm:$0xff]
    %v138 = vld [vmem:[#allocation5 + $0x240] sm:$0xff]
    %v139 = vld [vmem:[#allocation5 + $0x248] sm:$0xff]
    %v140 = vld [vmem:[#allocation5 + $0x250] sm:$0xff]
    %v141 = vld [vmem:[#allocation5 + $0x258] sm:$0xff]
    %v142 = vld [vmem:[#allocation5 + $0x260] sm:$0xff]
    %v143 = vld [vmem:[#allocation5 + $0x268] sm:$0xff]
    %v144 = vld [vmem:[#allocation5 + $0x270] sm:$0xff]
    %v145 = vld [vmem:[#allocation5 + $0x278] sm:$0xff]
    %v146 = vld [vmem:[%s2] sm:$0x1f]
    %v148 = vlaneseq
    %v149 = vshrl.u32 %v148, 7
    %v150 = vsub.s32 0, %v149
    %v151 = vrot.slane %v146, %v150
    %v152 = vlaneseq
    %v153 = vshrl.u32 %v152, 7
    %v154 = vsub.s32 1, %v153
    %v155 = vrot.slane %v146, %v154
    %v156 = vlaneseq
    %v157 = vshrl.u32 %v156, 7
    %v158 = vsub.s32 2, %v157
    %v159 = vrot.slane %v146, %v158
    %v160 = vlaneseq
    %v161 = vshrl.u32 %v160, 7
    %v162 = vsub.s32 3, %v161
    %v163 = vrot.slane %v146, %v162
    %v164 = vlaneseq
    %v165 = vshrl.u32 %v164, 7
    %v166 = vsub.s32 4, %v165
    %v167 = vrot.slane %v146, %v166
    %173 = vmatprep.subr.mxu0 %v67
    %174 = vmatpush1.msra.mxu0 %v66
    %175 = vmatprep.subr.mxu0 %v72
    %176 = vmatpush1.msra.mxu0 %v71
    %177 = vmatprep.subr.mxu0 %v77
    %178 = vmatpush1.msra.mxu0 %v76
    %179 = vmatprep.subr.mxu0 %v82
    %180 = vmatpush1.msra.mxu0 %v81
    %181 = vmatprep.subr.mxu0 %v87
    %182 = vmatpush1.msra.mxu0 %v86
    %183 = vmatprep.subr.mxu0 %v92
    %184 = vmatpush1.msra.mxu0 %v91
    %185 = vmatprep.subr.mxu0 %v97
    %186 = vmatpush1.msra.mxu0 %v96
    %187 = vmatprep.subr.mxu0 %v102
    %188 = vmatpush1.msra.mxu0 %v101
    %189 = vmatprep.subr.mxu0 %v107
    %190 = vmatpush1.msra.mxu0 %v106
    %191 = vmatprep.subr.mxu0 %v112
    %192 = vmatpush1.msra.mxu0 %v111
    %193 = vmatprep.subr.mxu0 %v117
    %194 = vmatpush1.msra.mxu0 %v116
    %195 = vmatprep.subr.mxu0 %v122
    %196 = vmatpush1.msra.mxu0 %v121
    %197 = vmatprep.subr.mxu0 %v127
    %198 = vmatpush1.msra.mxu0 %v126
    %199 = vmatprep.subr.mxu0 %v132
    %200 = vmatpush1.msra.mxu0 %v131
    %201 = vmatprep.subr.mxu0 %v137
    %202 = vmatpush1.msra.mxu0 %v136
    %203 = vmatprep.subr.mxu0 %v142
    %204 = vmatpush1.msra.mxu0 %v141
    %205 = vmatprep.subr.mxu0 0.0
    %206 = vmatpush1.msra.mxu0 0.0
    %207 = vmatprep.subr.mxu0 0.0
    %208 = vmatpush1.msra.mxu0 0.0
    %209 = vmatprep.subr.mxu0 0.0
    %210 = vmatpush1.msra.mxu0 0.0
    %211 = vmatprep.subr.mxu0 0.0
    %212 = vmatpush1.msra.mxu0 0.0
    %213 = vmatprep.subr.mxu0 0.0
    %214 = vmatpush1.msra.mxu0 0.0
    %215 = vmatprep.subr.mxu0 0.0
    %216 = vmatpush1.msra.mxu0 0.0
    %217 = vmatprep.subr.mxu0 0.0
    %218 = vmatpush1.msra.mxu0 0.0
    %219 = vmatprep.subr.mxu0 0.0
    %220 = vmatpush1.msra.mxu0 0.0
    %221 = vmatprep.subr.mxu0 0.0
    %222 = vmatpush1.msra.mxu0 0.0
    %223 = vmatprep.subr.mxu0 0.0
    %224 = vmatpush1.msra.mxu0 0.0
    %225 = vmatprep.subr.mxu0 0.0
    %226 = vmatpush1.msra.mxu0 0.0
    %227 = vmatprep.subr.mxu0 0.0
    %228 = vmatpush1.msra.mxu0 0.0
    %229 = vmatprep.subr.mxu0 0.0
    %230 = vmatpush1.msra.mxu0 0.0
    %231 = vmatprep.subr.mxu0 0.0
    %232 = vmatpush1.msra.mxu0 0.0
    %233 = vmatprep.subr.mxu0 0.0
    %234 = vmatpush1.msra.mxu0 0.0
    %235 = vmatprep.subr.mxu0 0.0
    %236 = vmatpush1.msra.mxu0 0.0
    %237 = vmatprep.mubr.f32.mxu0 0.0
    %238 = vmatmul.mubr.f32.gmra.mrb[0].mxu0 %v62
    %v239 = vpop.f32.mrb[0].mxu0
    %v240 = vadd.f32 %v151, %v239
    %v241 = vpop.f32.mrb[0].mxu0
    %v242 = vadd.f32 %v155, %v241
    %243 = vmatprep.mubr.f32.mxu0 0.0
    %244 = vmatmul.mubr.f32.gmra.mrb[0].mxu0 %v63
    %v245 = vpop.f32.mrb[0].mxu0
    %v246 = vadd.f32 %v151, %v245
    %v247 = vpop.f32.mrb[0].mxu0
    %v248 = vadd.f32 %v155, %v247
    %249 = vmatprep.mubr.f32.mxu0 0.0
    %250 = vmatmul.mubr.f32.gmra.mrb[0].mxu0 %v64
    %v251 = vpop.f32.mrb[0].mxu0
    %v252 = vadd.f32 %v151, %v251
    %v253 = vpop.f32.mrb[0].mxu0
    %v254 = vadd.f32 %v155, %v253
    %255 = vmatprep.mubr.f32.mxu0 0.0
    %256 = vmatmul.mubr.f32.gmra.mrb[0].mxu0 %v65
    %v257 = vpop.f32.mrb[0].mxu0
    %v258 = vadd.f32 %v151, %v257
    %v259 = vpop.f32.mrb[0].mxu0
    %v260 = vadd.f32 %v155, %v259
    %261 = vdwg.mxu0
    %262 = vmatprep.subr.mxu0 %v69
    %263 = vmatpush1.msra.mxu0 %v68
    %264 = vmatprep.subr.mxu0 %v74
    %265 = vmatpush1.msra.mxu0 %v73
    %266 = vmatprep.subr.mxu0 %v79
    %267 = vmatpush1.msra.mxu0 %v78
    %268 = vmatprep.subr.mxu0 %v84
    %269 = vmatpush1.msra.mxu0 %v83
    %270 = vmatprep.subr.mxu0 %v89
    %271 = vmatpush1.msra.mxu0 %v88
    %272 = vmatprep.subr.mxu0 %v94
    %273 = vmatpush1.msra.mxu0 %v93
    %274 = vmatprep.subr.mxu0 %v99
    %275 = vmatpush1.msra.mxu0 %v98
    %276 = vmatprep.subr.mxu0 %v104
    %277 = vmatpush1.msra.mxu0 %v103
    %278 = vmatprep.subr.mxu0 %v109
    %279 = vmatpush1.msra.mxu0 %v108
    %280 = vmatprep.subr.mxu0 %v114
    %281 = vmatpush1.msra.mxu0 %v113
    %282 = vmatprep.subr.mxu0 %v119
    %283 = vmatpush1.msra.mxu0 %v118
    %284 = vmatprep.subr.mxu0 %v124
    %285 = vmatpush1.msra.mxu0 %v123
    %286 = vmatprep.subr.mxu0 %v129
    %287 = vmatpush1.msra.mxu0 %v128
    %288 = vmatprep.subr.mxu0 %v134
    %289 = vmatpush1.msra.mxu0 %v133
    %290 = vmatprep.subr.mxu0 %v139
    %291 = vmatpush1.msra.mxu0 %v138
    %292 = vmatprep.subr.mxu0 %v144
    %293 = vmatpush1.msra.mxu0 %v143
    %294 = vmatprep.subr.mxu0 0.0
    %295 = vmatpush1.msra.mxu0 0.0
    %296 = vmatprep.subr.mxu0 0.0
    %297 = vmatpush1.msra.mxu0 0.0
    %298 = vmatprep.subr.mxu0 0.0
    %299 = vmatpush1.msra.mxu0 0.0
    %300 = vmatprep.subr.mxu0 0.0
    %301 = vmatpush1.msra.mxu0 0.0
    %302 = vmatprep.subr.mxu0 0.0
    %303 = vmatpush1.msra.mxu0 0.0
    %304 = vmatprep.subr.mxu0 0.0
    %305 = vmatpush1.msra.mxu0 0.0
    %306 = vmatprep.subr.mxu0 0.0
    %307 = vmatpush1.msra.mxu0 0.0
    %308 = vmatprep.subr.mxu0 0.0
    %309 = vmatpush1.msra.mxu0 0.0
    %310 = vmatprep.subr.mxu0 0.0
    %311 = vmatpush1.msra.mxu0 0.0
    %312 = vmatprep.subr.mxu0 0.0
    %313 = vmatpush1.msra.mxu0 0.0
    %314 = vmatprep.subr.mxu0 0.0
    %315 = vmatpush1.msra.mxu0 0.0
    %316 = vmatprep.subr.mxu0 0.0
    %317 = vmatpush1.msra.mxu0 0.0
    %318 = vmatprep.subr.mxu0 0.0
    %319 = vmatpush1.msra.mxu0 0.0
    %320 = vmatprep.subr.mxu0 0.0
    %321 = vmatpush1.msra.mxu0 0.0
    %322 = vmatprep.subr.mxu0 0.0
    %323 = vmatpush1.msra.mxu0 0.0
    %324 = vmatprep.subr.mxu0 0.0
    %325 = vmatpush1.msra.mxu0 0.0
    %326 = vmatprep.mubr.f32.mxu0 0.0
    %327 = vmatmul.mubr.f32.gmra.mrb[0].mxu0 %v62
    %v328 = vpop.f32.mrb[0].mxu0
    %v329 = vadd.f32 %v159, %v328
    %v330 = vpop.f32.mrb[0].mxu0
    %v331 = vadd.f32 %v163, %v330
    %332 = vmatprep.mubr.f32.mxu0 0.0
    %333 = vmatmul.mubr.f32.gmra.mrb[0].mxu0 %v63
    %v334 = vpop.f32.mrb[0].mxu0
    %v335 = vadd.f32 %v159, %v334
    %v336 = vpop.f32.mrb[0].mxu0
    %v337 = vadd.f32 %v163, %v336
    %338 = vmatprep.mubr.f32.mxu0 0.0
    %339 = vmatmul.mubr.f32.gmra.mrb[0].mxu0 %v64
    %v340 = vpop.f32.mrb[0].mxu0
    %v341 = vadd.f32 %v159, %v340
    %v342 = vpop.f32.mrb[0].mxu0
    %v343 = vadd.f32 %v163, %v342
    %344 = vmatprep.mubr.f32.mxu0 0.0
    %345 = vmatmul.mubr.f32.gmra.mrb[0].mxu0 %v65
    %v346 = vpop.f32.mrb[0].mxu0
    %v347 = vadd.f32 %v159, %v346
    %v348 = vpop.f32.mrb[0].mxu0
    %v349 = vadd.f32 %v163, %v348
    %350 = vdwg.mxu0
    %351 = vmatprep.subr.mxu0 0.0
    %352 = vmatpush1.msra.mxu0 %v70
    %353 = vmatprep.subr.mxu0 0.0
    %354 = vmatpush1.msra.mxu0 %v75
    %355 = vmatprep.subr.mxu0 0.0
    %356 = vmatpush1.msra.mxu0 %v80
    %357 = vmatprep.subr.mxu0 0.0
    %358 = vmatpush1.msra.mxu0 %v85
    %359 = vmatprep.subr.mxu0 0.0
    %360 = vmatpush1.msra.mxu0 %v90
    %361 = vmatprep.subr.mxu0 0.0
    %362 = vmatpush1.msra.mxu0 %v95
    %363 = vmatprep.subr.mxu0 0.0
    %364 = vmatpush1.msra.mxu0 %v100
    %365 = vmatprep.subr.mxu0 0.0
    %366 = vmatpush1.msra.mxu0 %v105
    %367 = vmatprep.subr.mxu0 0.0
    %368 = vmatpush1.msra.mxu0 %v110
    %369 = vmatprep.subr.mxu0 0.0
    %370 = vmatpush1.msra.mxu0 %v115
    %371 = vmatprep.subr.mxu0 0.0
    %372 = vmatpush1.msra.mxu0 %v120
    %373 = vmatprep.subr.mxu0 0.0
    %374 = vmatpush1.msra.mxu0 %v125
    %375 = vmatprep.subr.mxu0 0.0
    %376 = vmatpush1.msra.mxu0 %v130
    %377 = vmatprep.subr.mxu0 0.0
    %378 = vmatpush1.msra.mxu0 %v135
    %379 = vmatprep.subr.mxu0 0.0
    %380 = vmatpush1.msra.mxu0 %v140
    %381 = vmatprep.subr.mxu0 0.0
    %382 = vmatpush1.msra.mxu0 %v145
    %383 = vmatprep.subr.mxu0 0.0
    %384 = vmatpush1.msra.mxu0 0.0
    %385 = vmatprep.subr.mxu0 0.0
    %386 = vmatpush1.msra.mxu0 0.0
    %387 = vmatprep.subr.mxu0 0.0
    %388 = vmatpush1.msra.mxu0 0.0
    %389 = vmatprep.subr.mxu0 0.0
    %390 = vmatpush1.msra.mxu0 0.0
    %391 = vmatprep.subr.mxu0 0.0
    %392 = vmatpush1.msra.mxu0 0.0
    %393 = vmatprep.subr.mxu0 0.0
    %394 = vmatpush1.msra.mxu0 0.0
    %395 = vmatprep.subr.mxu0 0.0
    %396 = vmatpush1.msra.mxu0 0.0
    %397 = vmatprep.subr.mxu0 0.0
    %398 = vmatpush1.msra.mxu0 0.0
    %399 = vmatprep.subr.mxu0 0.0
    %400 = vmatpush1.msra.mxu0 0.0
    %401 = vmatprep.subr.mxu0 0.0
    %402 = vmatpush1.msra.mxu0 0.0
    %403 = vmatprep.subr.mxu0 0.0
    %404 = vmatpush1.msra.mxu0 0.0
    %405 = vmatprep.subr.mxu0 0.0
    %406 = vmatpush1.msra.mxu0 0.0
    %407 = vmatprep.subr.mxu0 0.0
    %408 = vmatpush1.msra.mxu0 0.0
    %409 = vmatprep.subr.mxu0 0.0
    %410 = vmatpush1.msra.mxu0 0.0
    %411 = vmatprep.subr.mxu0 0.0
    %412 = vmatpush1.msra.mxu0 0.0
    %413 = vmatprep.subr.mxu0 0.0
    %414 = vmatpush1.msra.mxu0 0.0
    %415 = vmatprep.mubr.f32.mxu0 0.0
    %416 = vmatmul.mubr.f32.gmra.mrb[0].mxu0 %v62
    %v417 = vpop.f32.mrb[0].mxu0
    %v418 = vadd.f32 %v167, %v417
    %v419 = vpop.f32.mrb[0].mxu0
    %420 = vmatprep.mubr.f32.mxu0 0.0
    %421 = vmatmul.mubr.f32.gmra.mrb[0].mxu0 %v63
    %v422 = vpop.f32.mrb[0].mxu0
    %v423 = vadd.f32 %v167, %v422
    %v424 = vpop.f32.mrb[0].mxu0
    %425 = vmatprep.mubr.f32.mxu0 0.0
    %426 = vmatmul.mubr.f32.gmra.mrb[0].mxu0 %v64
    %v427 = vpop.f32.mrb[0].mxu0
    %v428 = vadd.f32 %v167, %v427
    %v429 = vpop.f32.mrb[0].mxu0
    %430 = vmatprep.mubr.f32.mxu0 0.0
    %431 = vmatmul.mubr.f32.gmra.mrb[0].mxu0 %v65
    %v432 = vpop.f32.mrb[0].mxu0
    %v433 = vadd.f32 %v167, %v432
    %v434 = vpop.f32.mrb[0].mxu0
    %435 = vdwg.mxu0
    %v436 = vmax.f32 %v240, 0.0
    %v437 = vmax.f32 %v242, 0.0
    %v438 = vmax.f32 %v329, 0.0
    %v439 = vmax.f32 %v331, 0.0
    %v440 = vmax.f32 %v418, 0.0
    %v441 = vmax.f32 %v246, 0.0
    %v442 = vmax.f32 %v248, 0.0
    %v443 = vmax.f32 %v335, 0.0
    %v444 = vmax.f32 %v337, 0.0
    %v445 = vmax.f32 %v423, 0.0
    %v446 = vmax.f32 %v252, 0.0
    %v447 = vmax.f32 %v254, 0.0
    %v448 = vmax.f32 %v341, 0.0
    %v449 = vmax.f32 %v343, 0.0
    %v450 = vmax.f32 %v428, 0.0
    %v451 = vmax.f32 %v258, 0.0
    %v452 = vmax.f32 %v260, 0.0
    %v453 = vmax.f32 %v347, 0.0
    %v454 = vmax.f32 %v349, 0.0
    %v455 = vmax.f32 %v433, 0.0
    %v456 = vld [vmem:[#allocation7] sm:$0xff]
    %v457 = vld [vmem:[#allocation7 + $0x8] sm:$0xff]
    %v458 = vld [vmem:[#allocation7 + $0x10] sm:$0xff]
    %v459 = vld [vmem:[#allocation7 + $0x18] sm:$0xff]
    %v460 = vld [vmem:[#allocation7 + $0x20] sm:$0xff]
    %v461 = vld [vmem:[#allocation7 + $0x28] sm:$0xff]
    %v462 = vld [vmem:[#allocation7 + $0x30] sm:$0xff]
    %v463 = vld [vmem:[#allocation7 + $0x38] sm:$0xff]
    %v464 = vld [vmem:[#allocation7 + $0x40] sm:$0xff]
    %v465 = vld [vmem:[#allocation7 + $0x48] sm:$0xff]
    %v466 = vld [vmem:[#allocation7 + $0x50] sm:$0xff]
    %v467 = vld [vmem:[#allocation7 + $0x58] sm:$0xff]
    %v468 = vld [vmem:[#allocation7 + $0x60] sm:$0xff]
    %v469 = vld [vmem:[#allocation7 + $0x68] sm:$0xff]
    %v470 = vld [vmem:[#allocation7 + $0x70] sm:$0xff]
    %v471 = vld [vmem:[#allocation7 + $0x78] sm:$0xff]
    %v472 = vld [vmem:[%s4] sm:$0x1]
    %v474 = vlaneseq
    %v475 = vshrl.u32 %v474, 7
    %v476 = vsub.s32 0, %v475
    %v477 = vrot.slane %v472, %v476
    %479 = vmatprep.subr.mxu0 0.0
    %480 = vmatpush1.msra.mxu0 %v456
    %481 = vmatprep.subr.mxu0 0.0
    %482 = vmatpush1.msra.mxu0 %v457
    %483 = vmatprep.subr.mxu0 0.0
    %484 = vmatpush1.msra.mxu0 %v458
    %485 = vmatprep.subr.mxu0 0.0
    %486 = vmatpush1.msra.mxu0 %v459
    %487 = vmatprep.subr.mxu0 0.0
    %488 = vmatpush1.msra.mxu0 %v460
    %489 = vmatprep.subr.mxu0 0.0
    %490 = vmatpush1.msra.mxu0 %v461
    %491 = vmatprep.subr.mxu0 0.0
    %492 = vmatpush1.msra.mxu0 %v462
    %493 = vmatprep.subr.mxu0 0.0
    %494 = vmatpush1.msra.mxu0 %v463
    %495 = vmatprep.subr.mxu0 0.0
    %496 = vmatpush1.msra.mxu0 %v464
    %497 = vmatprep.subr.mxu0 0.0
    %498 = vmatpush1.msra.mxu0 %v465
    %499 = vmatprep.subr.mxu0 0.0
    %500 = vmatpush1.msra.mxu0 %v466
    %501 = vmatprep.subr.mxu0 0.0
    %502 = vmatpush1.msra.mxu0 %v467
    %503 = vmatprep.subr.mxu0 0.0
    %504 = vmatpush1.msra.mxu0 %v468
    %505 = vmatprep.subr.mxu0 0.0
    %506 = vmatpush1.msra.mxu0 %v469
    %507 = vmatprep.subr.mxu0 0.0
    %508 = vmatpush1.msra.mxu0 %v470
    %509 = vmatprep.subr.mxu0 0.0
    %510 = vmatpush1.msra.mxu0 %v471
    %511 = vmatprep.subr.mxu0 0.0
    %512 = vmatpush1.msra.mxu0 0.0
    %513 = vmatprep.subr.mxu0 0.0
    %514 = vmatpush1.msra.mxu0 0.0
    %515 = vmatprep.subr.mxu0 0.0
    %516 = vmatpush1.msra.mxu0 0.0
    %517 = vmatprep.subr.mxu0 0.0
    %518 = vmatpush1.msra.mxu0 0.0
    %519 = vmatprep.subr.mxu0 0.0
    %520 = vmatpush1.msra.mxu0 0.0
    %521 = vmatprep.subr.mxu0 0.0
    %522 = vmatpush1.msra.mxu0 0.0
    %523 = vmatprep.subr.mxu0 0.0
    %524 = vmatpush1.msra.mxu0 0.0
    %525 = vmatprep.subr.mxu0 0.0
    %526 = vmatpush1.msra.mxu0 0.0
    %527 = vmatprep.subr.mxu0 0.0
    %528 = vmatpush1.msra.mxu0 0.0
    %529 = vmatprep.subr.mxu0 0.0
    %530 = vmatpush1.msra.mxu0 0.0
    %531 = vmatprep.subr.mxu0 0.0
    %532 = vmatpush1.msra.mxu0 0.0
    %533 = vmatprep.subr.mxu0 0.0
    %534 = vmatpush1.msra.mxu0 0.0
    %535 = vmatprep.subr.mxu0 0.0
    %536 = vmatpush1.msra.mxu0 0.0
    %537 = vmatprep.subr.mxu0 0.0
    %538 = vmatpush1.msra.mxu0 0.0
    %539 = vmatprep.subr.mxu0 0.0
    %540 = vmatpush1.msra.mxu0 0.0
    %541 = vmatprep.subr.mxu0 0.0
    %542 = vmatpush1.msra.mxu0 0.0
    %543 = vmatprep.mubr.f32.mxu0 0.0
    %544 = vmatmul.mubr.f32.gmra.mrb[0].mxu0 %v436
    %v545 = vpop.f32.mrb[0].mxu0
    %v546 = vadd.f32 %v477, %v545
    %v547 = vpop.f32.mrb[0].mxu0
    %548 = vmatprep.mubr.f32.mxu0 0.0
    %549 = vmatmul.mubr.f32.gmra.mrb[0].mxu0 %v441
    %v550 = vpop.f32.mrb[0].mxu0
    %v551 = vadd.f32 %v477, %v550
    %v552 = vpop.f32.mrb[0].mxu0
    %553 = vmatprep.mubr.f32.mxu0 0.0
    %554 = vmatmul.mubr.f32.gmra.mrb[0].mxu0 %v446
    %v555 = vpop.f32.mrb[0].mxu0
    %v556 = vadd.f32 %v477, %v555
    %v557 = vpop.f32.mrb[0].mxu0
    %558 = vmatprep.mubr.f32.mxu0 0.0
    %559 = vmatmul.mubr.f32.gmra.mrb[0].mxu0 %v451
    %v560 = vpop.f32.mrb[0].mxu0
    %v561 = vadd.f32 %v477, %v560
    %v562 = vpop.f32.mrb[0].mxu0
    %563 = vdwg.mxu0
    %564 = vst [vmem:[#allocation8] sm:$0xff] %v546
    %565 = vst [vmem:[#allocation8 + $0x28] sm:$0xff] %v551
    %566 = vst [vmem:[#allocation8 + $0x50] sm:$0xff] %v556
    %567 = vst [vmem:[#allocation8 + $0x78] sm:$0xff] %v561
    %568 = vmatprep.subr.mxu0 0.0
    %569 = vmatpush1.msra.mxu0 %v456
    %570 = vmatprep.subr.mxu0 0.0
    %571 = vmatpush1.msra.mxu0 %v457
    %572 = vmatprep.subr.mxu0 0.0
    %573 = vmatpush1.msra.mxu0 %v458
    %574 = vmatprep.subr.mxu0 0.0
    %575 = vmatpush1.msra.mxu0 %v459
    %576 = vmatprep.subr.mxu0 0.0
    %577 = vmatpush1.msra.mxu0 %v460
    %578 = vmatprep.subr.mxu0 0.0
    %579 = vmatpush1.msra.mxu0 %v461
    %580 = vmatprep.subr.mxu0 0.0
    %581 = vmatpush1.msra.mxu0 %v462
    %582 = vmatprep.subr.mxu0 0.0
    %583 = vmatpush1.msra.mxu0 %v463
    %584 = vmatprep.subr.mxu0 0.0
    %585 = vmatpush1.msra.mxu0 %v464
    %586 = vmatprep.subr.mxu0 0.0
    %587 = vmatpush1.msra.mxu0 %v465
    %588 = vmatprep.subr.mxu0 0.0
    %589 = vmatpush1.msra.mxu0 %v466
    %590 = vmatprep.subr.mxu0 0.0
    %591 = vmatpush1.msra.mxu0 %v467
    %592 = vmatprep.subr.mxu0 0.0
    %593 = vmatpush1.msra.mxu0 %v468
    %594 = vmatprep.subr.mxu0 0.0
    %595 = vmatpush1.msra.mxu0 %v469
    %596 = vmatprep.subr.mxu0 0.0
    %597 = vmatpush1.msra.mxu0 %v470
    %598 = vmatprep.subr.mxu0 0.0
    %599 = vmatpush1.msra.mxu0 %v471
    %600 = vmatprep.subr.mxu0 0.0
    %601 = vmatpush1.msra.mxu0 0.0
    %602 = vmatprep.subr.mxu0 0.0
    %603 = vmatpush1.msra.mxu0 0.0
    %604 = vmatprep.subr.mxu0 0.0
    %605 = vmatpush1.msra.mxu0 0.0
    %606 = vmatprep.subr.mxu0 0.0
    %607 = vmatpush1.msra.mxu0 0.0
    %608 = vmatprep.subr.mxu0 0.0
    %609 = vmatpush1.msra.mxu0 0.0
    %610 = vmatprep.subr.mxu0 0.0
    %611 = vmatpush1.msra.mxu0 0.0
    %612 = vmatprep.subr.mxu0 0.0
    %613 = vmatpush1.msra.mxu0 0.0
    %614 = vmatprep.subr.mxu0 0.0
    %615 = vmatpush1.msra.mxu0 0.0
    %616 = vmatprep.subr.mxu0 0.0
    %617 = vmatpush1.msra.mxu0 0.0
    %618 = vmatprep.subr.mxu0 0.0
    %619 = vmatpush1.msra.mxu0 0.0
    %620 = vmatprep.subr.mxu0 0.0
    %621 = vmatpush1.msra.mxu0 0.0
    %622 = vmatprep.subr.mxu0 0.0
    %623 = vmatpush1.msra.mxu0 0.0
    %624 = vmatprep.subr.mxu0 0.0
    %625 = vmatpush1.msra.mxu0 0.0
    %626 = vmatprep.subr.mxu0 0.0
    %627 = vmatpush1.msra.mxu0 0.0
    %628 = vmatprep.subr.mxu0 0.0
    %629 = vmatpush1.msra.mxu0 0.0
    %630 = vmatprep.subr.mxu0 0.0
    %631 = vmatpush1.msra.mxu0 0.0
    %632 = vmatprep.mubr.f32.mxu0 0.0
    %633 = vmatmul.mubr.f32.gmra.mrb[0].mxu0 %v437
    %v634 = vpop.f32.mrb[0].mxu0
    %v635 = vadd.f32 %v477, %v634
    %v636 = vpop.f32.mrb[0].mxu0
    %637 = vmatprep.mubr.f32.mxu0 0.0
    %638 = vmatmul.mubr.f32.gmra.mrb[0].mxu0 %v442
    %v639 = vpop.f32.mrb[0].mxu0
    %v640 = vadd.f32 %v477, %v639
    %v641 = vpop.f32.mrb[0].mxu0
    %642 = vmatprep.mubr.f32.mxu0 0.0
    %643 = vmatmul.mubr.f32.gmra.mrb[0].mxu0 %v447
    %v644 = vpop.f32.mrb[0].mxu0
    %v645 = vadd.f32 %v477, %v644
    %v646 = vpop.f32.mrb[0].mxu0
    %647 = vmatprep.mubr.f32.mxu0 0.0
    %648 = vmatmul.mubr.f32.gmra.mrb[0].mxu0 %v452
    %v649 = vpop.f32.mrb[0].mxu0
    %v650 = vadd.f32 %v477, %v649
    %v651 = vpop.f32.mrb[0].mxu0
    %652 = vdwg.mxu0
    %653 = vst [vmem:[#allocation8 + $0x8] sm:$0xff] %v635
    %654 = vst [vmem:[#allocation8 + $0x30] sm:$0xff] %v640
    %655 = vst [vmem:[#allocation8 + $0x58] sm:$0xff] %v645
    %656 = vst [vmem:[#allocation8 + $0x80] sm:$0xff] %v650
    %657 = vmatprep.subr.mxu0 0.0
    %658 = vmatpush1.msra.mxu0 %v456
    %659 = vmatprep.subr.mxu0 0.0
    %660 = vmatpush1.msra.mxu0 %v457
    %661 = vmatprep.subr.mxu0 0.0
    %662 = vmatpush1.msra.mxu0 %v458
    %663 = vmatprep.subr.mxu0 0.0
    %664 = vmatpush1.msra.mxu0 %v459
    %665 = vmatprep.subr.mxu0 0.0
    %666 = vmatpush1.msra.mxu0 %v460
    %667 = vmatprep.subr.mxu0 0.0
    %668 = vmatpush1.msra.mxu0 %v461
    %669 = vmatprep.subr.mxu0 0.0
    %670 = vmatpush1.msra.mxu0 %v462
    %671 = vmatprep.subr.mxu0 0.0
    %672 = vmatpush1.msra.mxu0 %v463
    %673 = vmatprep.subr.mxu0 0.0
    %674 = vmatpush1.msra.mxu0 %v464
    %675 = vmatprep.subr.mxu0 0.0
    %676 = vmatpush1.msra.mxu0 %v465
    %677 = vmatprep.subr.mxu0 0.0
    %678 = vmatpush1.msra.mxu0 %v466
    %679 = vmatprep.subr.mxu0 0.0
    %680 = vmatpush1.msra.mxu0 %v467
    %681 = vmatprep.subr.mxu0 0.0
    %682 = vmatpush1.msra.mxu0 %v468
    %683 = vmatprep.subr.mxu0 0.0
    %684 = vmatpush1.msra.mxu0 %v469
    %685 = vmatprep.subr.mxu0 0.0
    %686 = vmatpush1.msra.mxu0 %v470
    %687 = vmatprep.subr.mxu0 0.0
    %688 = vmatpush1.msra.mxu0 %v471
    %689 = vmatprep.subr.mxu0 0.0
    %690 = vmatpush1.msra.mxu0 0.0
    %691 = vmatprep.subr.mxu0 0.0
    %692 = vmatpush1.msra.mxu0 0.0
    %693 = vmatprep.subr.mxu0 0.0
    %694 = vmatpush1.msra.mxu0 0.0
    %695 = vmatprep.subr.mxu0 0.0
    %696 = vmatpush1.msra.mxu0 0.0
    %697 = vmatprep.subr.mxu0 0.0
    %698 = vmatpush1.msra.mxu0 0.0
    %699 = vmatprep.subr.mxu0 0.0
    %700 = vmatpush1.msra.mxu0 0.0
    %701 = vmatprep.subr.mxu0 0.0
    %702 = vmatpush1.msra.mxu0 0.0
    %703 = vmatprep.subr.mxu0 0.0
    %704 = vmatpush1.msra.mxu0 0.0
    %705 = vmatprep.subr.mxu0 0.0
    %706 = vmatpush1.msra.mxu0 0.0
    %707 = vmatprep.subr.mxu0 0.0
    %708 = vmatpush1.msra.mxu0 0.0
    %709 = vmatprep.subr.mxu0 0.0
    %710 = vmatpush1.msra.mxu0 0.0
    %711 = vmatprep.subr.mxu0 0.0
    %712 = vmatpush1.msra.mxu0 0.0
    %713 = vmatprep.subr.mxu0 0.0
    %714 = vmatpush1.msra.mxu0 0.0
    %715 = vmatprep.subr.mxu0 0.0
    %716 = vmatpush1.msra.mxu0 0.0
    %717 = vmatprep.subr.mxu0 0.0
    %718 = vmatpush1.msra.mxu0 0.0
    %719 = vmatprep.subr.mxu0 0.0
    %720 = vmatpush1.msra.mxu0 0.0
    %721 = vmatprep.mubr.f32.mxu0 0.0
    %722 = vmatmul.mubr.f32.gmra.mrb[0].mxu0 %v438
    %v723 = vpop.f32.mrb[0].mxu0
    %v724 = vadd.f32 %v477, %v723
    %v725 = vpop.f32.mrb[0].mxu0
    %726 = vmatprep.mubr.f32.mxu0 0.0
    %727 = vmatmul.mubr.f32.gmra.mrb[0].mxu0 %v443
    %v728 = vpop.f32.mrb[0].mxu0
    %v729 = vadd.f32 %v477, %v728
    %v730 = vpop.f32.mrb[0].mxu0
    %731 = vmatprep.mubr.f32.mxu0 0.0
    %732 = vmatmul.mubr.f32.gmra.mrb[0].mxu0 %v448
    %v733 = vpop.f32.mrb[0].mxu0
    %v734 = vadd.f32 %v477, %v733
    %v735 = vpop.f32.mrb[0].mxu0
    %736 = vmatprep.mubr.f32.mxu0 0.0
    %737 = vmatmul.mubr.f32.gmra.mrb[0].mxu0 %v453
    %v738 = vpop.f32.mrb[0].mxu0
    %v739 = vadd.f32 %v477, %v738
    %v740 = vpop.f32.mrb[0].mxu0
    %741 = vdwg.mxu0
    %742 = vst [vmem:[#allocation8 + $0x10] sm:$0xff] %v724
    %743 = vst [vmem:[#allocation8 + $0x38] sm:$0xff] %v729
    %744 = vst [vmem:[#allocation8 + $0x60] sm:$0xff] %v734
    %745 = vst [vmem:[#allocation8 + $0x88] sm:$0xff] %v739
    %746 = vmatprep.subr.mxu0 0.0
    %747 = vmatpush1.msra.mxu0 %v456
    %748 = vmatprep.subr.mxu0 0.0
    %749 = vmatpush1.msra.mxu0 %v457
    %750 = vmatprep.subr.mxu0 0.0
    %751 = vmatpush1.msra.mxu0 %v458
    %752 = vmatprep.subr.mxu0 0.0
    %753 = vmatpush1.msra.mxu0 %v459
    %754 = vmatprep.subr.mxu0 0.0
    %755 = vmatpush1.msra.mxu0 %v460
    %756 = vmatprep.subr.mxu0 0.0
    %757 = vmatpush1.msra.mxu0 %v461
    %758 = vmatprep.subr.mxu0 0.0
    %759 = vmatpush1.msra.mxu0 %v462
    %760 = vmatprep.subr.mxu0 0.0
    %761 = vmatpush1.msra.mxu0 %v463
    %762 = vmatprep.subr.mxu0 0.0
    %763 = vmatpush1.msra.mxu0 %v464
    %764 = vmatprep.subr.mxu0 0.0
    %765 = vmatpush1.msra.mxu0 %v465
    %766 = vmatprep.subr.mxu0 0.0
    %767 = vmatpush1.msra.mxu0 %v466
    %768 = vmatprep.subr.mxu0 0.0
    %769 = vmatpush1.msra.mxu0 %v467
    %770 = vmatprep.subr.mxu0 0.0
    %771 = vmatpush1.msra.mxu0 %v468
    %772 = vmatprep.subr.mxu0 0.0
    %773 = vmatpush1.msra.mxu0 %v469
    %774 = vmatprep.subr.mxu0 0.0
    %775 = vmatpush1.msra.mxu0 %v470
    %776 = vmatprep.subr.mxu0 0.0
    %777 = vmatpush1.msra.mxu0 %v471
    %778 = vmatprep.subr.mxu0 0.0
    %779 = vmatpush1.msra.mxu0 0.0
    %780 = vmatprep.subr.mxu0 0.0
    %781 = vmatpush1.msra.mxu0 0.0
    %782 = vmatprep.subr.mxu0 0.0
    %783 = vmatpush1.msra.mxu0 0.0
    %784 = vmatprep.subr.mxu0 0.0
    %785 = vmatpush1.msra.mxu0 0.0
    %786 = vmatprep.subr.mxu0 0.0
    %787 = vmatpush1.msra.mxu0 0.0
    %788 = vmatprep.subr.mxu0 0.0
    %789 = vmatpush1.msra.mxu0 0.0
    %790 = vmatprep.subr.mxu0 0.0
    %791 = vmatpush1.msra.mxu0 0.0
    %792 = vmatprep.subr.mxu0 0.0
    %793 = vmatpush1.msra.mxu0 0.0
    %794 = vmatprep.subr.mxu0 0.0
    %795 = vmatpush1.msra.mxu0 0.0
    %796 = vmatprep.subr.mxu0 0.0
    %797 = vmatpush1.msra.mxu0 0.0
    %798 = vmatprep.subr.mxu0 0.0
    %799 = vmatpush1.msra.mxu0 0.0
    %800 = vmatprep.subr.mxu0 0.0
    %801 = vmatpush1.msra.mxu0 0.0
    %802 = vmatprep.subr.mxu0 0.0
    %803 = vmatpush1.msra.mxu0 0.0
    %804 = vmatprep.subr.mxu0 0.0
    %805 = vmatpush1.msra.mxu0 0.0
    %806 = vmatprep.subr.mxu0 0.0
    %807 = vmatpush1.msra.mxu0 0.0
    %808 = vmatprep.subr.mxu0 0.0
    %809 = vmatpush1.msra.mxu0 0.0
    %810 = vmatprep.mubr.f32.mxu0 0.0
    %811 = vmatmul.mubr.f32.gmra.mrb[0].mxu0 %v439
    %v812 = vpop.f32.mrb[0].mxu0
    %v813 = vadd.f32 %v477, %v812
    %v814 = vpop.f32.mrb[0].mxu0
    %815 = vmatprep.mubr.f32.mxu0 0.0
    %816 = vmatmul.mubr.f32.gmra.mrb[0].mxu0 %v444
    %v817 = vpop.f32.mrb[0].mxu0
    %v818 = vadd.f32 %v477, %v817
    %v819 = vpop.f32.mrb[0].mxu0
    %820 = vmatprep.mubr.f32.mxu0 0.0
    %821 = vmatmul.mubr.f32.gmra.mrb[0].mxu0 %v449
    %v822 = vpop.f32.mrb[0].mxu0
    %v823 = vadd.f32 %v477, %v822
    %v824 = vpop.f32.mrb[0].mxu0
    %825 = vmatprep.mubr.f32.mxu0 0.0
    %826 = vmatmul.mubr.f32.gmra.mrb[0].mxu0 %v454
    %v827 = vpop.f32.mrb[0].mxu0
    %v828 = vadd.f32 %v477, %v827
    %v829 = vpop.f32.mrb[0].mxu0
    %830 = vdwg.mxu0
    %831 = vst [vmem:[#allocation8 + $0x18] sm:$0xff] %v813
    %832 = vst [vmem:[#allocation8 + $0x40] sm:$0xff] %v818
    %833 = vst [vmem:[#allocation8 + $0x68] sm:$0xff] %v823
    %834 = vst [vmem:[#allocation8 + $0x90] sm:$0xff] %v828
    %835 = vmatprep.subr.mxu0 0.0
    %836 = vmatpush1.msra.mxu0 %v456
    %837 = vmatprep.subr.mxu0 0.0
    %838 = vmatpush1.msra.mxu0 %v457
    %839 = vmatprep.subr.mxu0 0.0
    %840 = vmatpush1.msra.mxu0 %v458
    %841 = vmatprep.subr.mxu0 0.0
    %842 = vmatpush1.msra.mxu0 %v459
    %843 = vmatprep.subr.mxu0 0.0
    %844 = vmatpush1.msra.mxu0 %v460
    %845 = vmatprep.subr.mxu0 0.0
    %846 = vmatpush1.msra.mxu0 %v461
    %847 = vmatprep.subr.mxu0 0.0
    %848 = vmatpush1.msra.mxu0 %v462
    %849 = vmatprep.subr.mxu0 0.0
    %850 = vmatpush1.msra.mxu0 %v463
    %851 = vmatprep.subr.mxu0 0.0
    %852 = vmatpush1.msra.mxu0 %v464
    %853 = vmatprep.subr.mxu0 0.0
    %854 = vmatpush1.msra.mxu0 %v465
    %855 = vmatprep.subr.mxu0 0.0
    %856 = vmatpush1.msra.mxu0 %v466
    %857 = vmatprep.subr.mxu0 0.0
    %858 = vmatpush1.msra.mxu0 %v467
    %859 = vmatprep.subr.mxu0 0.0
    %860 = vmatpush1.msra.mxu0 %v468
    %861 = vmatprep.subr.mxu0 0.0
    %862 = vmatpush1.msra.mxu0 %v469
    %863 = vmatprep.subr.mxu0 0.0
    %864 = vmatpush1.msra.mxu0 %v470
    %865 = vmatprep.subr.mxu0 0.0
    %866 = vmatpush1.msra.mxu0 %v471
    %867 = vmatprep.subr.mxu0 0.0
    %868 = vmatpush1.msra.mxu0 0.0
    %869 = vmatprep.subr.mxu0 0.0
    %870 = vmatpush1.msra.mxu0 0.0
    %871 = vmatprep.subr.mxu0 0.0
    %872 = vmatpush1.msra.mxu0 0.0
    %873 = vmatprep.subr.mxu0 0.0
    %874 = vmatpush1.msra.mxu0 0.0
    %875 = vmatprep.subr.mxu0 0.0
    %876 = vmatpush1.msra.mxu0 0.0
    %877 = vmatprep.subr.mxu0 0.0
    %878 = vmatpush1.msra.mxu0 0.0
    %879 = vmatprep.subr.mxu0 0.0
    %880 = vmatpush1.msra.mxu0 0.0
    %881 = vmatprep.subr.mxu0 0.0
    %882 = vmatpush1.msra.mxu0 0.0
    %883 = vmatprep.subr.mxu0 0.0
    %884 = vmatpush1.msra.mxu0 0.0
    %885 = vmatprep.subr.mxu0 0.0
    %886 = vmatpush1.msra.mxu0 0.0
    %887 = vmatprep.subr.mxu0 0.0
    %888 = vmatpush1.msra.mxu0 0.0
    %889 = vmatprep.subr.mxu0 0.0
    %890 = vmatpush1.msra.mxu0 0.0
    %891 = vmatprep.subr.mxu0 0.0
    %892 = vmatpush1.msra.mxu0 0.0
    %893 = vmatprep.subr.mxu0 0.0
    %894 = vmatpush1.msra.mxu0 0.0
    %895 = vmatprep.subr.mxu0 0.0
    %896 = vmatpush1.msra.mxu0 0.0
    %897 = vmatprep.subr.mxu0 0.0
    %898 = vmatpush1.msra.mxu0 0.0
    %899 = vmatprep.mubr.f32.mxu0 0.0
    %900 = vmatmul.mubr.f32.gmra.mrb[0].mxu0 %v440
    %v901 = vpop.f32.mrb[0].mxu0
    %v902 = vadd.f32 %v477, %v901
    %v903 = vpop.f32.mrb[0].mxu0
    %904 = vmatprep.mubr.f32.mxu0 0.0
    %905 = vmatmul.mubr.f32.gmra.mrb[0].mxu0 %v445
    %v906 = vpop.f32.mrb[0].mxu0
    %v907 = vadd.f32 %v477, %v906
    %v908 = vpop.f32.mrb[0].mxu0
    %909 = vmatprep.mubr.f32.mxu0 0.0
    %910 = vmatmul.mubr.f32.gmra.mrb[0].mxu0 %v450
    %v911 = vpop.f32.mrb[0].mxu0
    %v912 = vadd.f32 %v477, %v911
    %v913 = vpop.f32.mrb[0].mxu0
    %914 = vmatprep.mubr.f32.mxu0 0.0
    %915 = vmatmul.mubr.f32.gmra.mrb[0].mxu0 %v455
    %v916 = vpop.f32.mrb[0].mxu0
    %v917 = vadd.f32 %v477, %v916
    %v918 = vpop.f32.mrb[0].mxu0
    %919 = vdwg.mxu0
    %920 = vst [vmem:[#allocation8 + $0x20] sm:$0xff] %v902
    %921 = vst [vmem:[#allocation8 + $0x48] sm:$0xff] %v907
    %922 = vst [vmem:[#allocation8 + $0x70] sm:$0xff] %v912
    %923 = vst [vmem:[#allocation8 + $0x98] sm:$0xff] %v917
    // Predicated region
    $region34: #{tpu_custom_call.1} parent=1 // pred_check
      _
    $region35: #{tpu_custom_call.1} parent=1 // pred_check_branch
      %925 = sbr.rel (0) target = $region37
    $region36: #{tpu_custom_call.1} parent=1 // pred_region
      %s927 = ssub.s32 2560, 2560
      %928 = vsyncadd [#allocation4], %s927
      %s929 = sshll.u32 [#allocation8], 4
      %s930 = int_to_ptr.vmem [resolvable:$true] %s929
      %935 = dma.vmem_to_hbm [thread:$0]  %s930, 2560, %s5, [#allocation4], 640, 640, 40
    $region37: #{tpu_custom_call.1} parent=1 // pred_fallthru
      _
    // Predicated region
    $region38: #{tpu_custom_call.1} parent=1 // pred_check
      _
    $region39: #{tpu_custom_call.1} parent=1 // pred_check_branch
      %937 = sbr.rel (0) target = $region41
    $region40: #{tpu_custom_call.1} parent=1 // pred_region
      %938 = dma.done [#allocation4], 2560
    $region41: #{tpu_custom_call.1} parent=1 // pred_fallthru
      _
    %939 = vsyncpa [#allocation3], 1
    %940 = vsyncpa [#allocation6], 1
    %941 = vsyncpa [#allocation4], 1

// kernel: tpu_custom_call.1
$region0: #{tpu_custom_call.1}
  #allocation0 [shape = 'u32[]', space=smem, size = 0x4, offset = 0x4, fixed_abs, tag = 'smem constant byte address 0x4 - core index']
  #allocation1 [shape = 'u32[144,128]{1,0:T(1,128)}', space=vmem, size = 0x12000, scoped, tag = 'internal scratch']
  %s0 = inlined_call_operand.hbm [shape: f32[32,128], index: 0, kind: input, shape index: {}]
  %s1 = inlined_call_operand.hbm [shape: f32[128,640], index: 1, kind: input, shape index: {}]
  %s2 = inlined_call_operand.vmem [shape: f32[1,640], index: 2, kind: input, shape index: {}]
  %s3 = inlined_call_operand.hbm [shape: f32[128,128], index: 3, kind: input, shape index: {}]
  %s4 = inlined_call_operand.vmem [shape: f32[1,128], index: 4, kind: input, shape index: {}]
  %s5 = inlined_call_operand.hbm [shape: f32[32,640], index: 5, kind: output, shape index: {}]
  %s6 = sld [smem:[#allocation0]]
  $region42: #{tpu_custom_call.1} parent=0
    _
  %s8 = ssub.s32 1, %s6
  %s9 = scalar_select 0, %s8, %s6
  $region1: #{tpu_custom_call.1} parent=0
    #allocation2 [shape = 'u8[16384]{0}', space=vmem, size = 0x4000, scoped, tag = 'input window, operand 0, single buffered']
    #allocation3 [shape = 's32[1]{0}', space=sflag, size = 0x4, scoped, tag = 'scoped memory for tpu_custom_call.1']
    #allocation4 [shape = 's32[1]{0}', space=sflag, size = 0x4, scoped, tag = 'scoped memory for tpu_custom_call.1']
    #allocation5 [shape = 'u8[327680]{0}', space=vmem, size = 0x50000, scoped, tag = 'input window, operand 1, single buffered']
    #allocation6 [shape = 's32[1]{0}', space=sflag, size = 0x4, scoped, tag = 'scoped memory for tpu_custom_call.1']
    #allocation7 [shape = 'u8[65536]{0}', space=vmem, size = 0x10000, scoped, tag = 'input window, operand 3, single buffered']
    #allocation8 [shape = 'u8[81920]{0}', space=vmem, size = 0x14000, scoped, tag = 'output window, operand 0, single buffered']
    %10 = vsyncpa [#allocation3], 0
    %11 = vsyncpa [#allocation6], 0
    %12 = vsyncpa [#allocation4], 0
    // Predicated region
    $region2: #{tpu_custom_call.1} parent=1 // pred_check
      _
    $region3: #{tpu_custom_call.1} parent=1 // pred_check_branch
      %14 = sbr.rel (0) target = $region5
    $region4: #{tpu_custom_call.1} parent=1 // pred_region
      %s16 = ssub.s32 512, 512
      %17 = vsyncadd [#allocation3], %s16
      %s18 = sshll.u32 [#allocation2], 4
      %s19 = int_to_ptr.vmem [resolvable:$true] %s18
      %24 = dma.hbm_to_vmem [thread:$0]  %s0, 512, %s19, [#allocation3], 128, 128, 8
    $region5: #{tpu_custom_call.1} parent=1 // pred_fallthru
      _
    // Predicated region
    $region6: #{tpu_custom_call.1} parent=1 // pred_check
      _
    $region7: #{tpu_custom_call.1} parent=1 // pred_check_branch
      %26 = sbr.rel (0) target = $region9
    $region8: #{tpu_custom_call.1} parent=1 // pred_region
      %s28 = ssub.s32 10240, 10240
      %29 = vsyncadd [#allocation6], %s28
      %s30 = sshll.u32 [#allocation5], 4
      %s31 = int_to_ptr.vmem [resolvable:$true] %s30
      %36 = dma.hbm_to_vmem [thread:$0]  %s1, 10240, %s31, [#allocation6], 640, 640, 40
    $region9: #{tpu_custom_call.1} parent=1 // pred_fallthru
      _
    // Predicated region
    $region10: #{tpu_custom_call.1} parent=1 // pred_check
      _
    $region11: #{tpu_custom_call.1} parent=1 // pred_check_branch
      %38 = sbr.rel (0) target = $region13
    $region12: #{tpu_custom_call.1} parent=1 // pred_region
      _
    $region13: #{tpu_custom_call.1} parent=1 // pred_fallthru
      _
    // Predicated region
    $region14: #{tpu_custom_call.1} parent=1 // pred_check
      _
    $region15: #{tpu_custom_call.1} parent=1 // pred_check_branch
      %40 = sbr.rel (0) target = $region17
    $region16: #{tpu_custom_call.1} parent=1 // pred_region
      %s42 = ssub.s32 2048, 2048
      %43 = vsyncadd [#allocation6], %s42
      %s44 = sshll.u32 [#allocation7], 4
      %s45 = int_to_ptr.vmem [resolvable:$true] %s44
      %50 = dma.hbm_to_vmem [thread:$0]  %s3, 2048, %s45, [#allocation6], 128, 128, 8
    $region17: #{tpu_custom_call.1} parent=1 // pred_fallthru
      _
    // Predicated region
    $region18: #{tpu_custom_call.1} parent=1 // pred_check
      _
    $region19: #{tpu_custom_call.1} parent=1 // pred_check_branch
      %52 = sbr.rel (0) target = $region21
    $region20: #{tpu_custom_call.1} parent=1 // pred_region
      _
    $region21: #{tpu_custom_call.1} parent=1 // pred_fallthru
      _
    // Predicated region
    $region22: #{tpu_custom_call.1} parent=1 // pred_check
      _
    $region23: #{tpu_custom_call.1} parent=1 // pred_check_branch
      %54 = sbr.rel (0) target = $region25
    $region24: #{tpu_custom_call.1} parent=1 // pred_region
      %55 = dma.done [#allocation3], 512
    $region25: #{tpu_custom_call.1} parent=1 // pred_fallthru
      _
    // Predicated region
    $region26: #{tpu_custom_call.1} parent=1 // pred_check
      _
    $region27: #{tpu_custom_call.1} parent=1 // pred_check_branch
      %57 = sbr.rel (0) target = $region29
    $region28: #{tpu_custom_call.1} parent=1 // pred_region
      %58 = dma.done [#allocation6], 10240
    $region29: #{tpu_custom_call.1} parent=1 // pred_fallthru
      _
    // Predicated region
    $region30: #{tpu_custom_call.1} parent=1 // pred_check
      _
    $region31: #{tpu_custom_call.1} parent=1 // pred_check_branch
      %60 = sbr.rel (0) target = $region33
    $region32: #{tpu_custom_call.1} parent=1 // pred_region
      %61 = dma.done [#allocation6], 2048
    $region33: #{tpu_custom_call.1} parent=1 // pred_fallthru
      _
    %v62 = vld [vmem:[#allocation2] sm:$0xff]
    %v63 = vld [vmem:[#allocation2 + $0x8] sm:$0xff]
    %v64 = vld [vmem:[#allocation2 + $0x10] sm:$0xff]
    %v65 = vld [vmem:[#allocation2 + $0x18] sm:$0xff]
    %v66 = vld [vmem:[#allocation5] sm:$0xff]
    %v67 = vld [vmem:[#allocation5 + $0x8] sm:$0xff]
    %v68 = vld [vmem:[#allocation5 + $0x10] sm:$0xff]
    %v69 = vld [vmem:[#allocation5 + $0x18] sm:$0xff]
    %v70 = vld [vmem:[#allocation5 + $0x20] sm:$0xff]
    %v71 = vld [vmem:[#allocation5 + $0x28] sm:$0xff]
    %v72 = vld [vmem:[#allocation5 + $0x30] sm:$0xff]
    %v73 = vld [vmem:[#allocation5 + $0x38] sm:$0xff]
    %v74 = vld [vmem:[#allocation5 + $0x40] sm:$0xff]
    %v75 = vld [vmem:[#allocation5 + $0x48] sm:$0xff]
    %v76 = vld [vmem:[#allocation5 + $0x50] sm:$0xff]
    %v77 = vld [vmem:[#allocation5 + $0x58] sm:$0xff]
    %v78 = vld [vmem:[#allocation5 + $0x60] sm:$0xff]
    %v79 = vld [vmem:[#allocation5 + $0x68] sm:$0xff]
    %v80 = vld [vmem:[#allocation5 + $0x70] sm:$0xff]
    %v81 = vld [vmem:[#allocation5 + $0x78] sm:$0xff]
    %v82 = vld [vmem:[#allocation5 + $0x80] sm:$0xff]
    %v83 = vld [vmem:[#allocation5 + $0x88] sm:$0xff]
    %v84 = vld [vmem:[#allocation5 + $0x90] sm:$0xff]
    %v85 = vld [vmem:[#allocation5 + $0x98] sm:$0xff]
    %v86 = vld [vmem:[#allocation5 + $0xa0] sm:$0xff]
    %v87 = vld [vmem:[#allocation5 + $0xa8] sm:$0xff]
    %v88 = vld [vmem:[#allocation5 + $0xb0] sm:$0xff]
    %v89 = vld [vmem:[#allocation5 + $0xb8] sm:$0xff]
    %v90 = vld [vmem:[#allocation5 + $0xc0] sm:$0xff]
    %v91 = vld [vmem:[#allocation5 + $0xc8] sm:$0xff]
    %v92 = vld [vmem:[#allocation5 + $0xd0] sm:$0xff]
    %v93 = vld [vmem:[#allocation5 + $0xd8] sm:$0xff]
    %v94 = vld [vmem:[#allocation5 + $0xe0] sm:$0xff]
    %v95 = vld [vmem:[#allocation5 + $0xe8] sm:$0xff]
    %v96 = vld [vmem:[#allocation5 + $0xf0] sm:$0xff]
    %v97 = vld [vmem:[#allocation5 + $0xf8] sm:$0xff]
    %v98 = vld [vmem:[#allocation5 + $0x100] sm:$0xff]
    %v99 = vld [vmem:[#allocation5 + $0x108] sm:$0xff]
    %v100 = vld [vmem:[#allocation5 + $0x110] sm:$0xff]
    %v101 = vld [vmem:[#allocation5 + $0x118] sm:$0xff]
    %v102 = vld [vmem:[#allocation5 + $0x120] sm:$0xff]
    %v103 = vld [vmem:[#allocation5 + $0x128] sm:$0xff]
    %v104 = vld [vmem:[#allocation5 + $0x130] sm:$0xff]
    %v105 = vld [vmem:[#allocation5 + $0x138] sm:$0xff]
    %v106 = vld [vmem:[#allocation5 + $0x140] sm:$0xff]
    %v107 = vld [vmem:[#allocation5 + $0x148] sm:$0xff]
    %v108 = vld [vmem:[#allocation5 + $0x150] sm:$0xff]
    %v109 = vld [vmem:[#allocation5 + $0x158] sm:$0xff]
    %v110 = vld [vmem:[#allocation5 + $0x160] sm:$0xff]
    %v111 = vld [vmem:[#allocation5 + $0x168] sm:$0xff]
    %v112 = vld [vmem:[#allocation5 + $0x170] sm:$0xff]
    %v113 = vld [vmem:[#allocation5 + $0x178] sm:$0xff]
    %v114 = vld [vmem:[#allocation5 + $0x180] sm:$0xff]
    %v115 = vld [vmem:[#allocation5 + $0x188] sm:$0xff]
    %v116 = vld [vmem:[#allocation5 + $0x190] sm:$0xff]
    %v117 = vld [vmem:[#allocation5 + $0x198] sm:$0xff]
    %v118 = vld [vmem:[#allocation5 + $0x1a0] sm:$0xff]
    %v119 = vld [vmem:[#allocation5 + $0x1a8] sm:$0xff]
    %v120 = vld [vmem:[#allocation5 + $0x1b0] sm:$0xff]
    %v121 = vld [vmem:[#allocation5 + $0x1b8] sm:$0xff]
    %v122 = vld [vmem:[#allocation5 + $0x1c0] sm:$0xff]
    %v123 = vld [vmem:[#allocation5 + $0x1c8] sm:$0xff]
    %v124 = vld [vmem:[#allocation5 + $0x1d0] sm:$0xff]
    %v125 = vld [vmem:[#allocation5 + $0x1d8] sm:$0xff]
    %v126 = vld [vmem:[#allocation5 + $0x1e0] sm:$0xff]
    %v127 = vld [vmem:[#allocation5 + $0x1e8] sm:$0xff]
    %v128 = vld [vmem:[#allocation5 + $0x1f0] sm:$0xff]
    %v129 = vld [vmem:[#allocation5 + $0x1f8] sm:$0xff]
    %v130 = vld [vmem:[#allocation5 + $0x200] sm:$0xff]
    %v131 = vld [vmem:[#allocation5 + $0x208] sm:$0xff]
    %v132 = vld [vmem:[#allocation5 + $0x210] sm:$0xff]
    %v133 = vld [vmem:[#allocation5 + $0x218] sm:$0xff]
    %v134 = vld [vmem:[#allocation5 + $0x220] sm:$0xff]
    %v135 = vld [vmem:[#allocation5 + $0x228] sm:$0xff]
    %v136 = vld [vmem:[#allocation5 + $0x230] sm:$0xff]
    %v137 = vld [vmem:[#allocation5 + $0x238] sm:$0xff]
    %v138 = vld [vmem:[#allocation5 + $0x240] sm:$0xff]
    %v139 = vld [vmem:[#allocation5 + $0x248] sm:$0xff]
    %v140 = vld [vmem:[#allocation5 + $0x250] sm:$0xff]
    %v141 = vld [vmem:[#allocation5 + $0x258] sm:$0xff]
    %v142 = vld [vmem:[#allocation5 + $0x260] sm:$0xff]
    %v143 = vld [vmem:[#allocation5 + $0x268] sm:$0xff]
    %v144 = vld [vmem:[#allocation5 + $0x270] sm:$0xff]
    %v145 = vld [vmem:[#allocation5 + $0x278] sm:$0xff]
    %v146 = vld [vmem:[%s2] sm:$0x1f]
    %v148 = vlaneseq
    %v149 = vshrl.u32 %v148, 7
    %v150 = vsub.s32 0, %v149
    %v151 = vrot.slane %v146, %v150
    %v152 = vlaneseq
    %v153 = vshrl.u32 %v152, 7
    %v154 = vsub.s32 1, %v153
    %v155 = vrot.slane %v146, %v154
    %v156 = vlaneseq
    %v157 = vshrl.u32 %v156, 7
    %v158 = vsub.s32 2, %v157
    %v159 = vrot.slane %v146, %v158
    %v160 = vlaneseq
    %v161 = vshrl.u32 %v160, 7
    %v162 = vsub.s32 3, %v161
    %v163 = vrot.slane %v146, %v162
    %v164 = vlaneseq
    %v165 = vshrl.u32 %v164, 7
    %v166 = vsub.s32 4, %v165
    %v167 = vrot.slane %v146, %v166
    %173 = vmatprep.subr.mxu0 %v67
    %174 = vmatpush1.msra.mxu0 %v66
    %175 = vmatprep.subr.mxu0 %v72
    %176 = vmatpush1.msra.mxu0 %v71
    %177 = vmatprep.subr.mxu0 %v77
    %178 = vmatpush1.msra.mxu0 %v76
    %179 = vmatprep.subr.mxu0 %v82
    %180 = vmatpush1.msra.mxu0 %v81
    %181 = vmatprep.subr.mxu0 %v87
    %182 = vmatpush1.msra.mxu0 %v86
    %183 = vmatprep.subr.mxu0 %v92
    %184 = vmatpush1.msra.mxu0 %v91
    %185 = vmatprep.subr.mxu0 %v97
    %186 = vmatpush1.msra.mxu0 %v96
    %187 = vmatprep.subr.mxu0 %v102
    %188 = vmatpush1.msra.mxu0 %v101
    %189 = vmatprep.subr.mxu0 %v107
    %190 = vmatpush1.msra.mxu0 %v106
    %191 = vmatprep.subr.mxu0 %v112
    %192 = vmatpush1.msra.mxu0 %v111
    %193 = vmatprep.subr.mxu0 %v117
    %194 = vmatpush1.msra.mxu0 %v116
    %195 = vmatprep.subr.mxu0 %v122
    %196 = vmatpush1.msra.mxu0 %v121
    %197 = vmatprep.subr.mxu0 %v127
    %198 = vmatpush1.msra.mxu0 %v126
    %199 = vmatprep.subr.mxu0 %v132
    %200 = vmatpush1.msra.mxu0 %v131
    %201 = vmatprep.subr.mxu0 %v137
    %202 = vmatpush1.msra.mxu0 %v136
    %203 = vmatprep.subr.mxu0 %v142
    %204 = vmatpush1.msra.mxu0 %v141
    %205 = vmatprep.subr.mxu0 0.0
    %206 = vmatpush1.msra.mxu0 0.0
    %207 = vmatprep.subr.mxu0 0.0
    %208 = vmatpush1.msra.mxu0 0.0
    %209 = vmatprep.subr.mxu0 0.0
    %210 = vmatpush1.msra.mxu0 0.0
    %211 = vmatprep.subr.mxu0 0.0
    %212 = vmatpush1.msra.mxu0 0.0
    %213 = vmatprep.subr.mxu0 0.0
    %214 = vmatpush1.msra.mxu0 0.0
    %215 = vmatprep.subr.mxu0 0.0
    %216 = vmatpush1.msra.mxu0 0.0
    %217 = vmatprep.subr.mxu0 0.0
    %218 = vmatpush1.msra.mxu0 0.0
    %219 = vmatprep.subr.mxu0 0.0
    %220 = vmatpush1.msra.mxu0 0.0
    %221 = vmatprep.subr.mxu0 0.0
    %222 = vmatpush1.msra.mxu0 0.0
    %223 = vmatprep.subr.mxu0 0.0
    %224 = vmatpush1.msra.mxu0 0.0
    %225 = vmatprep.subr.mxu0 0.0
    %226 = vmatpush1.msra.mxu0 0.0
    %227 = vmatprep.subr.mxu0 0.0
    %228 = vmatpush1.msra.mxu0 0.0
    %229 = vmatprep.subr.mxu0 0.0
    %230 = vmatpush1.msra.mxu0 0.0
    %231 = vmatprep.subr.mxu0 0.0
    %232 = vmatpush1.msra.mxu0 0.0
    %233 = vmatprep.subr.mxu0 0.0
    %234 = vmatpush1.msra.mxu0 0.0
    %235 = vmatprep.subr.mxu0 0.0
    %236 = vmatpush1.msra.mxu0 0.0
    %237 = vmatprep.mubr.f32.mxu0 0.0
    %238 = vmatmul.mubr.f32.gmra.mrb[0].mxu0 %v62
    %v239 = vpop.f32.mrb[0].mxu0
    %v240 = vadd.f32 %v151, %v239
    %v241 = vpop.f32.mrb[0].mxu0
    %v242 = vadd.f32 %v155, %v241
    %243 = vmatprep.mubr.f32.mxu0 0.0
    %244 = vmatmul.mubr.f32.gmra.mrb[0].mxu0 %v63
    %v245 = vpop.f32.mrb[0].mxu0
    %v246 = vadd.f32 %v151, %v245
    %v247 = vpop.f32.mrb[0].mxu0
    %v248 = vadd.f32 %v155, %v247
    %249 = vmatprep.mubr.f32.mxu0 0.0
    %250 = vmatmul.mubr.f32.gmra.mrb[0].mxu0 %v64
    %v251 = vpop.f32.mrb[0].mxu0
    %v252 = vadd.f32 %v151, %v251
    %v253 = vpop.f32.mrb[0].mxu0
    %v254 = vadd.f32 %v155, %v253
    %255 = vmatprep.mubr.f32.mxu0 0.0
    %256 = vmatmul.mubr.f32.gmra.mrb[0].mxu0 %v65
    %v257 = vpop.f32.mrb[0].mxu0
    %v258 = vadd.f32 %v151, %v257
    %v259 = vpop.f32.mrb[0].mxu0
    %v260 = vadd.f32 %v155, %v259
    %261 = vdwg.mxu0
    %262 = vmatprep.subr.mxu0 %v69
    %263 = vmatpush1.msra.mxu0 %v68
    %264 = vmatprep.subr.mxu0 %v74
    %265 = vmatpush1.msra.mxu0 %v73
    %266 = vmatprep.subr.mxu0 %v79
    %267 = vmatpush1.msra.mxu0 %v78
    %268 = vmatprep.subr.mxu0 %v84
    %269 = vmatpush1.msra.mxu0 %v83
    %270 = vmatprep.subr.mxu0 %v89
    %271 = vmatpush1.msra.mxu0 %v88
    %272 = vmatprep.subr.mxu0 %v94
    %273 = vmatpush1.msra.mxu0 %v93
    %274 = vmatprep.subr.mxu0 %v99
    %275 = vmatpush1.msra.mxu0 %v98
    %276 = vmatprep.subr.mxu0 %v104
    %277 = vmatpush1.msra.mxu0 %v103
    %278 = vmatprep.subr.mxu0 %v109
    %279 = vmatpush1.msra.mxu0 %v108
    %280 = vmatprep.subr.mxu0 %v114
    %281 = vmatpush1.msra.mxu0 %v113
    %282 = vmatprep.subr.mxu0 %v119
    %283 = vmatpush1.msra.mxu0 %v118
    %284 = vmatprep.subr.mxu0 %v124
    %285 = vmatpush1.msra.mxu0 %v123
    %286 = vmatprep.subr.mxu0 %v129
    %287 = vmatpush1.msra.mxu0 %v128
    %288 = vmatprep.subr.mxu0 %v134
    %289 = vmatpush1.msra.mxu0 %v133
    %290 = vmatprep.subr.mxu0 %v139
    %291 = vmatpush1.msra.mxu0 %v138
    %292 = vmatprep.subr.mxu0 %v144
    %293 = vmatpush1.msra.mxu0 %v143
    %294 = vmatprep.subr.mxu0 0.0
    %295 = vmatpush1.msra.mxu0 0.0
    %296 = vmatprep.subr.mxu0 0.0
    %297 = vmatpush1.msra.mxu0 0.0
    %298 = vmatprep.subr.mxu0 0.0
    %299 = vmatpush1.msra.mxu0 0.0
    %300 = vmatprep.subr.mxu0 0.0
    %301 = vmatpush1.msra.mxu0 0.0
    %302 = vmatprep.subr.mxu0 0.0
    %303 = vmatpush1.msra.mxu0 0.0
    %304 = vmatprep.subr.mxu0 0.0
    %305 = vmatpush1.msra.mxu0 0.0
    %306 = vmatprep.subr.mxu0 0.0
    %307 = vmatpush1.msra.mxu0 0.0
    %308 = vmatprep.subr.mxu0 0.0
    %309 = vmatpush1.msra.mxu0 0.0
    %310 = vmatprep.subr.mxu0 0.0
    %311 = vmatpush1.msra.mxu0 0.0
    %312 = vmatprep.subr.mxu0 0.0
    %313 = vmatpush1.msra.mxu0 0.0
    %314 = vmatprep.subr.mxu0 0.0
    %315 = vmatpush1.msra.mxu0 0.0
    %316 = vmatprep.subr.mxu0 0.0
    %317 = vmatpush1.msra.mxu0 0.0
    %318 = vmatprep.subr.mxu0 0.0
    %319 = vmatpush1.msra.mxu0 0.0
    %320 = vmatprep.subr.mxu0 0.0
    %321 = vmatpush1.msra.mxu0 0.0
    %322 = vmatprep.subr.mxu0 0.0
    %323 = vmatpush1.msra.mxu0 0.0
    %324 = vmatprep.subr.mxu0 0.0
    %325 = vmatpush1.msra.mxu0 0.0
    %326 = vmatprep.mubr.f32.mxu0 0.0
    %327 = vmatmul.mubr.f32.gmra.mrb[0].mxu0 %v62
    %v328 = vpop.f32.mrb[0].mxu0
    %v329 = vadd.f32 %v159, %v328
    %v330 = vpop.f32.mrb[0].mxu0
    %v331 = vadd.f32 %v163, %v330
    %332 = vmatprep.mubr.f32.mxu0 0.0
    %333 = vmatmul.mubr.f32.gmra.mrb[0].mxu0 %v63
    %v334 = vpop.f32.mrb[0].mxu0
    %v335 = vadd.f32 %v159, %v334
    %v336 = vpop.f32.mrb[0].mxu0
    %v337 = vadd.f32 %v163, %v336
    %338 = vmatprep.mubr.f32.mxu0 0.0
    %339 = vmatmul.mubr.f32.gmra.mrb[0].mxu0 %v64
    %v340 = vpop.f32.mrb[0].mxu0
    %v341 = vadd.f32 %v159, %v340
    %v342 = vpop.f32.mrb[0].mxu0
    %v343 = vadd.f32 %v163, %v342
    %344 = vmatprep.mubr.f32.mxu0 0.0
    %345 = vmatmul.mubr.f32.gmra.mrb[0].mxu0 %v65
    %v346 = vpop.f32.mrb[0].mxu0
    %v347 = vadd.f32 %v159, %v346
    %v348 = vpop.f32.mrb[0].mxu0
    %v349 = vadd.f32 %v163, %v348
    %350 = vdwg.mxu0
    %351 = vmatprep.subr.mxu0 0.0
    %352 = vmatpush1.msra.mxu0 %v70
    %353 = vmatprep.subr.mxu0 0.0
    %354 = vmatpush1.msra.mxu0 %v75
    %355 = vmatprep.subr.mxu0 0.0
    %356 = vmatpush1.msra.mxu0 %v80
    %357 = vmatprep.subr.mxu0 0.0
    %358 = vmatpush1.msra.mxu0 %v85
    %359 = vmatprep.subr.mxu0 0.0
    %360 = vmatpush1.msra.mxu0 %v90
    %361 = vmatprep.subr.mxu0 0.0
    %362 = vmatpush1.msra.mxu0 %v95
    %363 = vmatprep.subr.mxu0 0.0
    %364 = vmatpush1.msra.mxu0 %v100
    %365 = vmatprep.subr.mxu0 0.0
    %366 = vmatpush1.msra.mxu0 %v105
    %367 = vmatprep.subr.mxu0 0.0
    %368 = vmatpush1.msra.mxu0 %v110
    %369 = vmatprep.subr.mxu0 0.0
    %370 = vmatpush1.msra.mxu0 %v115
    %371 = vmatprep.subr.mxu0 0.0
    %372 = vmatpush1.msra.mxu0 %v120
    %373 = vmatprep.subr.mxu0 0.0
    %374 = vmatpush1.msra.mxu0 %v125
    %375 = vmatprep.subr.mxu0 0.0
    %376 = vmatpush1.msra.mxu0 %v130
    %377 = vmatprep.subr.mxu0 0.0
    %378 = vmatpush1.msra.mxu0 %v135
    %379 = vmatprep.subr.mxu0 0.0
    %380 = vmatpush1.msra.mxu0 %v140
    %381 = vmatprep.subr.mxu0 0.0
    %382 = vmatpush1.msra.mxu0 %v145
    %383 = vmatprep.subr.mxu0 0.0
    %384 = vmatpush1.msra.mxu0 0.0
    %385 = vmatprep.subr.mxu0 0.0
    %386 = vmatpush1.msra.mxu0 0.0
    %387 = vmatprep.subr.mxu0 0.0
    %388 = vmatpush1.msra.mxu0 0.0
    %389 = vmatprep.subr.mxu0 0.0
    %390 = vmatpush1.msra.mxu0 0.0
    %391 = vmatprep.subr.mxu0 0.0
    %392 = vmatpush1.msra.mxu0 0.0
    %393 = vmatprep.subr.mxu0 0.0
    %394 = vmatpush1.msra.mxu0 0.0
    %395 = vmatprep.subr.mxu0 0.0
    %396 = vmatpush1.msra.mxu0 0.0
    %397 = vmatprep.subr.mxu0 0.0
    %398 = vmatpush1.msra.mxu0 0.0
    %399 = vmatprep.subr.mxu0 0.0
    %400 = vmatpush1.msra.mxu0 0.0
    %401 = vmatprep.subr.mxu0 0.0
    %402 = vmatpush1.msra.mxu0 0.0
    %403 = vmatprep.subr.mxu0 0.0
    %404 = vmatpush1.msra.mxu0 0.0
    %405 = vmatprep.subr.mxu0 0.0
    %406 = vmatpush1.msra.mxu0 0.0
    %407 = vmatprep.subr.mxu0 0.0
    %408 = vmatpush1.msra.mxu0 0.0
    %409 = vmatprep.subr.mxu0 0.0
    %410 = vmatpush1.msra.mxu0 0.0
    %411 = vmatprep.subr.mxu0 0.0
    %412 = vmatpush1.msra.mxu0 0.0
    %413 = vmatprep.subr.mxu0 0.0
    %414 = vmatpush1.msra.mxu0 0.0
    %415 = vmatprep.mubr.f32.mxu0 0.0
    %416 = vmatmul.mubr.f32.gmra.mrb[0].mxu0 %v62
    %v417 = vpop.f32.mrb[0].mxu0
    %v418 = vadd.f32 %v167, %v417
    %v419 = vpop.f32.mrb[0].mxu0
    %420 = vmatprep.mubr.f32.mxu0 0.0
    %421 = vmatmul.mubr.f32.gmra.mrb[0].mxu0 %v63
    %v422 = vpop.f32.mrb[0].mxu0
    %v423 = vadd.f32 %v167, %v422
    %v424 = vpop.f32.mrb[0].mxu0
    %425 = vmatprep.mubr.f32.mxu0 0.0
    %426 = vmatmul.mubr.f32.gmra.mrb[0].mxu0 %v64
    %v427 = vpop.f32.mrb[0].mxu0
    %v428 = vadd.f32 %v167, %v427
    %v429 = vpop.f32.mrb[0].mxu0
    %430 = vmatprep.mubr.f32.mxu0 0.0
    %431 = vmatmul.mubr.f32.gmra.mrb[0].mxu0 %v65
    %v432 = vpop.f32.mrb[0].mxu0
    %v433 = vadd.f32 %v167, %v432
    %v434 = vpop.f32.mrb[0].mxu0
    %435 = vdwg.mxu0
    %v436 = vmax.f32 %v240, 0.0
    %v437 = vmax.f32 %v242, 0.0
    %v438 = vmax.f32 %v329, 0.0
    %v439 = vmax.f32 %v331, 0.0
    %v440 = vmax.f32 %v418, 0.0
    %v441 = vmax.f32 %v246, 0.0
    %v442 = vmax.f32 %v248, 0.0
    %v443 = vmax.f32 %v335, 0.0
    %v444 = vmax.f32 %v337, 0.0
    %v445 = vmax.f32 %v423, 0.0
    %v446 = vmax.f32 %v252, 0.0
    %v447 = vmax.f32 %v254, 0.0
    %v448 = vmax.f32 %v341, 0.0
    %v449 = vmax.f32 %v343, 0.0
    %v450 = vmax.f32 %v428, 0.0
    %v451 = vmax.f32 %v258, 0.0
    %v452 = vmax.f32 %v260, 0.0
    %v453 = vmax.f32 %v347, 0.0
    %v454 = vmax.f32 %v349, 0.0
    %v455 = vmax.f32 %v433, 0.0
    %v456 = vld [vmem:[#allocation7] sm:$0xff]
    %v457 = vld [vmem:[#allocation7 + $0x8] sm:$0xff]
    %v458 = vld [vmem:[#allocation7 + $0x10] sm:$0xff]
    %v459 = vld [vmem:[#allocation7 + $0x18] sm:$0xff]
    %v460 = vld [vmem:[#allocation7 + $0x20] sm:$0xff]
    %v461 = vld [vmem:[#allocation7 + $0x28] sm:$0xff]
    %v462 = vld [vmem:[#allocation7 + $0x30] sm:$0xff]
    %v463 = vld [vmem:[#allocation7 + $0x38] sm:$0xff]
    %v464 = vld [vmem:[#allocation7 + $0x40] sm:$0xff]
    %v465 = vld [vmem:[#allocation7 + $0x48] sm:$0xff]
    %v466 = vld [vmem:[#allocation7 + $0x50] sm:$0xff]
    %v467 = vld [vmem:[#allocation7 + $0x58] sm:$0xff]
    %v468 = vld [vmem:[#allocation7 + $0x60] sm:$0xff]
    %v469 = vld [vmem:[#allocation7 + $0x68] sm:$0xff]
    %v470 = vld [vmem:[#allocation7 + $0x70] sm:$0xff]
    %v471 = vld [vmem:[#allocation7 + $0x78] sm:$0xff]
    %v472 = vld [vmem:[%s4] sm:$0x1]
    %v474 = vlaneseq
    %v475 = vshrl.u32 %v474, 7
    %v476 = vsub.s32 0, %v475
    %v477 = vrot.slane %v472, %v476
    %479 = vmatprep.subr.mxu0 0.0
    %480 = vmatpush1.msra.mxu0 %v456
    %481 = vmatprep.subr.mxu0 0.0
    %482 = vmatpush1.msra.mxu0 %v457
    %483 = vmatprep.subr.mxu0 0.0
    %484 = vmatpush1.msra.mxu0 %v458
    %485 = vmatprep.subr.mxu0 0.0
    %486 = vmatpush1.msra.mxu0 %v459
    %487 = vmatprep.subr.mxu0 0.0
    %488 = vmatpush1.msra.mxu0 %v460
    %489 = vmatprep.subr.mxu0 0.0
    %490 = vmatpush1.msra.mxu0 %v461
    %491 = vmatprep.subr.mxu0 0.0
    %492 = vmatpush1.msra.mxu0 %v462
    %493 = vmatprep.subr.mxu0 0.0
    %494 = vmatpush1.msra.mxu0 %v463
    %495 = vmatprep.subr.mxu0 0.0
    %496 = vmatpush1.msra.mxu0 %v464
    %497 = vmatprep.subr.mxu0 0.0
    %498 = vmatpush1.msra.mxu0 %v465
    %499 = vmatprep.subr.mxu0 0.0
    %500 = vmatpush1.msra.mxu0 %v466
    %501 = vmatprep.subr.mxu0 0.0
    %502 = vmatpush1.msra.mxu0 %v467
    %503 = vmatprep.subr.mxu0 0.0
    %504 = vmatpush1.msra.mxu0 %v468
    %505 = vmatprep.subr.mxu0 0.0
    %506 = vmatpush1.msra.mxu0 %v469
    %507 = vmatprep.subr.mxu0 0.0
    %508 = vmatpush1.msra.mxu0 %v470
    %509 = vmatprep.subr.mxu0 0.0
    %510 = vmatpush1.msra.mxu0 %v471
    %511 = vmatprep.subr.mxu0 0.0
    %512 = vmatpush1.msra.mxu0 0.0
    %513 = vmatprep.subr.mxu0 0.0
    %514 = vmatpush1.msra.mxu0 0.0
    %515 = vmatprep.subr.mxu0 0.0
    %516 = vmatpush1.msra.mxu0 0.0
    %517 = vmatprep.subr.mxu0 0.0
    %518 = vmatpush1.msra.mxu0 0.0
    %519 = vmatprep.subr.mxu0 0.0
    %520 = vmatpush1.msra.mxu0 0.0
    %521 = vmatprep.subr.mxu0 0.0
    %522 = vmatpush1.msra.mxu0 0.0
    %523 = vmatprep.subr.mxu0 0.0
    %524 = vmatpush1.msra.mxu0 0.0
    %525 = vmatprep.subr.mxu0 0.0
    %526 = vmatpush1.msra.mxu0 0.0
    %527 = vmatprep.subr.mxu0 0.0
    %528 = vmatpush1.msra.mxu0 0.0
    %529 = vmatprep.subr.mxu0 0.0
    %530 = vmatpush1.msra.mxu0 0.0
    %531 = vmatprep.subr.mxu0 0.0
    %532 = vmatpush1.msra.mxu0 0.0
    %533 = vmatprep.subr.mxu0 0.0
    %534 = vmatpush1.msra.mxu0 0.0
    %535 = vmatprep.subr.mxu0 0.0
    %536 = vmatpush1.msra.mxu0 0.0
    %537 = vmatprep.subr.mxu0 0.0
    %538 = vmatpush1.msra.mxu0 0.0
    %539 = vmatprep.subr.mxu0 0.0
    %540 = vmatpush1.msra.mxu0 0.0
    %541 = vmatprep.subr.mxu0 0.0
    %542 = vmatpush1.msra.mxu0 0.0
    %543 = vmatprep.mubr.f32.mxu0 0.0
    %544 = vmatmul.mubr.f32.gmra.mrb[0].mxu0 %v436
    %v545 = vpop.f32.mrb[0].mxu0
    %v546 = vadd.f32 %v477, %v545
    %v547 = vpop.f32.mrb[0].mxu0
    %548 = vmatprep.mubr.f32.mxu0 0.0
    %549 = vmatmul.mubr.f32.gmra.mrb[0].mxu0 %v441
    %v550 = vpop.f32.mrb[0].mxu0
    %v551 = vadd.f32 %v477, %v550
    %v552 = vpop.f32.mrb[0].mxu0
    %553 = vmatprep.mubr.f32.mxu0 0.0
    %554 = vmatmul.mubr.f32.gmra.mrb[0].mxu0 %v446
    %v555 = vpop.f32.mrb[0].mxu0
    %v556 = vadd.f32 %v477, %v555
    %v557 = vpop.f32.mrb[0].mxu0
    %558 = vmatprep.mubr.f32.mxu0 0.0
    %559 = vmatmul.mubr.f32.gmra.mrb[0].mxu0 %v451
    %v560 = vpop.f32.mrb[0].mxu0
    %v561 = vadd.f32 %v477, %v560
    %v562 = vpop.f32.mrb[0].mxu0
    %563 = vdwg.mxu0
    %564 = vst [vmem:[#allocation8] sm:$0xff] %v546
    %565 = vst [vmem:[#allocation8 + $0x28] sm:$0xff] %v551
    %566 = vst [vmem:[#allocation8 + $0x50] sm:$0xff] %v556
    %567 = vst [vmem:[#allocation8 + $0x78] sm:$0xff] %v561
    %568 = vmatprep.subr.mxu0 0.0
    %569 = vmatpush1.msra.mxu0 %v456
    %570 = vmatprep.subr.mxu0 0.0
    %571 = vmatpush1.msra.mxu0 %v457
    %572 = vmatprep.subr.mxu0 0.0
    %573 = vmatpush1.msra.mxu0 %v458
    %574 = vmatprep.subr.mxu0 0.0
    %575 = vmatpush1.msra.mxu0 %v459
    %576 = vmatprep.subr.mxu0 0.0
    %577 = vmatpush1.msra.mxu0 %v460
    %578 = vmatprep.subr.mxu0 0.0
    %579 = vmatpush1.msra.mxu0 %v461
    %580 = vmatprep.subr.mxu0 0.0
    %581 = vmatpush1.msra.mxu0 %v462
    %582 = vmatprep.subr.mxu0 0.0
    %583 = vmatpush1.msra.mxu0 %v463
    %584 = vmatprep.subr.mxu0 0.0
    %585 = vmatpush1.msra.mxu0 %v464
    %586 = vmatprep.subr.mxu0 0.0
    %587 = vmatpush1.msra.mxu0 %v465
    %588 = vmatprep.subr.mxu0 0.0
    %589 = vmatpush1.msra.mxu0 %v466
    %590 = vmatprep.subr.mxu0 0.0
    %591 = vmatpush1.msra.mxu0 %v467
    %592 = vmatprep.subr.mxu0 0.0
    %593 = vmatpush1.msra.mxu0 %v468
    %594 = vmatprep.subr.mxu0 0.0
    %595 = vmatpush1.msra.mxu0 %v469
    %596 = vmatprep.subr.mxu0 0.0
    %597 = vmatpush1.msra.mxu0 %v470
    %598 = vmatprep.subr.mxu0 0.0
    %599 = vmatpush1.msra.mxu0 %v471
    %600 = vmatprep.subr.mxu0 0.0
    %601 = vmatpush1.msra.mxu0 0.0
    %602 = vmatprep.subr.mxu0 0.0
    %603 = vmatpush1.msra.mxu0 0.0
    %604 = vmatprep.subr.mxu0 0.0
    %605 = vmatpush1.msra.mxu0 0.0
    %606 = vmatprep.subr.mxu0 0.0
    %607 = vmatpush1.msra.mxu0 0.0
    %608 = vmatprep.subr.mxu0 0.0
    %609 = vmatpush1.msra.mxu0 0.0
    %610 = vmatprep.subr.mxu0 0.0
    %611 = vmatpush1.msra.mxu0 0.0
    %612 = vmatprep.subr.mxu0 0.0
    %613 = vmatpush1.msra.mxu0 0.0
    %614 = vmatprep.subr.mxu0 0.0
    %615 = vmatpush1.msra.mxu0 0.0
    %616 = vmatprep.subr.mxu0 0.0
    %617 = vmatpush1.msra.mxu0 0.0
    %618 = vmatprep.subr.mxu0 0.0
    %619 = vmatpush1.msra.mxu0 0.0
    %620 = vmatprep.subr.mxu0 0.0
    %621 = vmatpush1.msra.mxu0 0.0
    %622 = vmatprep.subr.mxu0 0.0
    %623 = vmatpush1.msra.mxu0 0.0
    %624 = vmatprep.subr.mxu0 0.0
    %625 = vmatpush1.msra.mxu0 0.0
    %626 = vmatprep.subr.mxu0 0.0
    %627 = vmatpush1.msra.mxu0 0.0
    %628 = vmatprep.subr.mxu0 0.0
    %629 = vmatpush1.msra.mxu0 0.0
    %630 = vmatprep.subr.mxu0 0.0
    %631 = vmatpush1.msra.mxu0 0.0
    %632 = vmatprep.mubr.f32.mxu0 0.0
    %633 = vmatmul.mubr.f32.gmra.mrb[0].mxu0 %v437
    %v634 = vpop.f32.mrb[0].mxu0
    %v635 = vadd.f32 %v477, %v634
    %v636 = vpop.f32.mrb[0].mxu0
    %637 = vmatprep.mubr.f32.mxu0 0.0
    %638 = vmatmul.mubr.f32.gmra.mrb[0].mxu0 %v442
    %v639 = vpop.f32.mrb[0].mxu0
    %v640 = vadd.f32 %v477, %v639
    %v641 = vpop.f32.mrb[0].mxu0
    %642 = vmatprep.mubr.f32.mxu0 0.0
    %643 = vmatmul.mubr.f32.gmra.mrb[0].mxu0 %v447
    %v644 = vpop.f32.mrb[0].mxu0
    %v645 = vadd.f32 %v477, %v644
    %v646 = vpop.f32.mrb[0].mxu0
    %647 = vmatprep.mubr.f32.mxu0 0.0
    %648 = vmatmul.mubr.f32.gmra.mrb[0].mxu0 %v452
    %v649 = vpop.f32.mrb[0].mxu0
    %v650 = vadd.f32 %v477, %v649
    %v651 = vpop.f32.mrb[0].mxu0
    %652 = vdwg.mxu0
    %653 = vst [vmem:[#allocation8 + $0x8] sm:$0xff] %v635
    %654 = vst [vmem:[#allocation8 + $0x30] sm:$0xff] %v640
    %655 = vst [vmem:[#allocation8 + $0x58] sm:$0xff] %v645
    %656 = vst [vmem:[#allocation8 + $0x80] sm:$0xff] %v650
    %657 = vmatprep.subr.mxu0 0.0
    %658 = vmatpush1.msra.mxu0 %v456
    %659 = vmatprep.subr.mxu0 0.0
    %660 = vmatpush1.msra.mxu0 %v457
    %661 = vmatprep.subr.mxu0 0.0
    %662 = vmatpush1.msra.mxu0 %v458
    %663 = vmatprep.subr.mxu0 0.0
    %664 = vmatpush1.msra.mxu0 %v459
    %665 = vmatprep.subr.mxu0 0.0
    %666 = vmatpush1.msra.mxu0 %v460
    %667 = vmatprep.subr.mxu0 0.0
    %668 = vmatpush1.msra.mxu0 %v461
    %669 = vmatprep.subr.mxu0 0.0
    %670 = vmatpush1.msra.mxu0 %v462
    %671 = vmatprep.subr.mxu0 0.0
    %672 = vmatpush1.msra.mxu0 %v463
    %673 = vmatprep.subr.mxu0 0.0
    %674 = vmatpush1.msra.mxu0 %v464
    %675 = vmatprep.subr.mxu0 0.0
    %676 = vmatpush1.msra.mxu0 %v465
    %677 = vmatprep.subr.mxu0 0.0
    %678 = vmatpush1.msra.mxu0 %v466
    %679 = vmatprep.subr.mxu0 0.0
    %680 = vmatpush1.msra.mxu0 %v467
    %681 = vmatprep.subr.mxu0 0.0
    %682 = vmatpush1.msra.mxu0 %v468
    %683 = vmatprep.subr.mxu0 0.0
    %684 = vmatpush1.msra.mxu0 %v469
    %685 = vmatprep.subr.mxu0 0.0
    %686 = vmatpush1.msra.mxu0 %v470
    %687 = vmatprep.subr.mxu0 0.0
    %688 = vmatpush1.msra.mxu0 %v471
    %689 = vmatprep.subr.mxu0 0.0
    %690 = vmatpush1.msra.mxu0 0.0
    %691 = vmatprep.subr.mxu0 0.0
    %692 = vmatpush1.msra.mxu0 0.0
    %693 = vmatprep.subr.mxu0 0.0
    %694 = vmatpush1.msra.mxu0 0.0
    %695 = vmatprep.subr.mxu0 0.0
    %696 = vmatpush1.msra.mxu0 0.0
    %697 = vmatprep.subr.mxu0 0.0
    %698 = vmatpush1.msra.mxu0 0.0
    %699 = vmatprep.subr.mxu0 0.0
    %700 = vmatpush1.msra.mxu0 0.0
    %701 = vmatprep.subr.mxu0 0.0
    %702 = vmatpush1.msra.mxu0 0.0
    %703 = vmatprep.subr.mxu0 0.0
    %704 = vmatpush1.msra.mxu0 0.0
    %705 = vmatprep.subr.mxu0 0.0
    %706 = vmatpush1.msra.mxu0 0.0
    %707 = vmatprep.subr.mxu0 0.0
    %708 = vmatpush1.msra.mxu0 0.0
    %709 = vmatprep.subr.mxu0 0.0
    %710 = vmatpush1.msra.mxu0 0.0
    %711 = vmatprep.subr.mxu0 0.0
    %712 = vmatpush1.msra.mxu0 0.0
    %713 = vmatprep.subr.mxu0 0.0
    %714 = vmatpush1.msra.mxu0 0.0
    %715 = vmatprep.subr.mxu0 0.0
    %716 = vmatpush1.msra.mxu0 0.0
    %717 = vmatprep.subr.mxu0 0.0
    %718 = vmatpush1.msra.mxu0 0.0
    %719 = vmatprep.subr.mxu0 0.0
    %720 = vmatpush1.msra.mxu0 0.0
    %721 = vmatprep.mubr.f32.mxu0 0.0
    %722 = vmatmul.mubr.f32.gmra.mrb[0].mxu0 %v438
    %v723 = vpop.f32.mrb[0].mxu0
    %v724 = vadd.f32 %v477, %v723
    %v725 = vpop.f32.mrb[0].mxu0
    %726 = vmatprep.mubr.f32.mxu0 0.0
    %727 = vmatmul.mubr.f32.gmra.mrb[0].mxu0 %v443
    %v728 = vpop.f32.mrb[0].mxu0
    %v729 = vadd.f32 %v477, %v728
    %v730 = vpop.f32.mrb[0].mxu0
    %731 = vmatprep.mubr.f32.mxu0 0.0
    %732 = vmatmul.mubr.f32.gmra.mrb[0].mxu0 %v448
    %v733 = vpop.f32.mrb[0].mxu0
    %v734 = vadd.f32 %v477, %v733
    %v735 = vpop.f32.mrb[0].mxu0
    %736 = vmatprep.mubr.f32.mxu0 0.0
    %737 = vmatmul.mubr.f32.gmra.mrb[0].mxu0 %v453
    %v738 = vpop.f32.mrb[0].mxu0
    %v739 = vadd.f32 %v477, %v738
    %v740 = vpop.f32.mrb[0].mxu0
    %741 = vdwg.mxu0
    %742 = vst [vmem:[#allocation8 + $0x10] sm:$0xff] %v724
    %743 = vst [vmem:[#allocation8 + $0x38] sm:$0xff] %v729
    %744 = vst [vmem:[#allocation8 + $0x60] sm:$0xff] %v734
    %745 = vst [vmem:[#allocation8 + $0x88] sm:$0xff] %v739
    %746 = vmatprep.subr.mxu0 0.0
    %747 = vmatpush1.msra.mxu0 %v456
    %748 = vmatprep.subr.mxu0 0.0
    %749 = vmatpush1.msra.mxu0 %v457
    %750 = vmatprep.subr.mxu0 0.0
    %751 = vmatpush1.msra.mxu0 %v458
    %752 = vmatprep.subr.mxu0 0.0
    %753 = vmatpush1.msra.mxu0 %v459
    %754 = vmatprep.subr.mxu0 0.0
    %755 = vmatpush1.msra.mxu0 %v460
    %756 = vmatprep.subr.mxu0 0.0
    %757 = vmatpush1.msra.mxu0 %v461
    %758 = vmatprep.subr.mxu0 0.0
    %759 = vmatpush1.msra.mxu0 %v462
    %760 = vmatprep.subr.mxu0 0.0
    %761 = vmatpush1.msra.mxu0 %v463
    %762 = vmatprep.subr.mxu0 0.0
    %763 = vmatpush1.msra.mxu0 %v464
    %764 = vmatprep.subr.mxu0 0.0
    %765 = vmatpush1.msra.mxu0 %v465
    %766 = vmatprep.subr.mxu0 0.0
    %767 = vmatpush1.msra.mxu0 %v466
    %768 = vmatprep.subr.mxu0 0.0
    %769 = vmatpush1.msra.mxu0 %v467
    %770 = vmatprep.subr.mxu0 0.0
    %771 = vmatpush1.msra.mxu0 %v468
    %772 = vmatprep.subr.mxu0 0.0
    %773 = vmatpush1.msra.mxu0 %v469
    %774 = vmatprep.subr.mxu0 0.0
    %775 = vmatpush1.msra.mxu0 %v470
    %776 = vmatprep.subr.mxu0 0.0
    %777 = vmatpush1.msra.mxu0 %v471
    %778 = vmatprep.subr.mxu0 0.0
    %779 = vmatpush1.msra.mxu0 0.0
    %780 = vmatprep.subr.mxu0 0.0
    %781 = vmatpush1.msra.mxu0 0.0
    %782 = vmatprep.subr.mxu0 0.0
    %783 = vmatpush1.msra.mxu0 0.0
    %784 = vmatprep.subr.mxu0 0.0
    %785 = vmatpush1.msra.mxu0 0.0
    %786 = vmatprep.subr.mxu0 0.0
    %787 = vmatpush1.msra.mxu0 0.0
    %788 = vmatprep.subr.mxu0 0.0
    %789 = vmatpush1.msra.mxu0 0.0
    %790 = vmatprep.subr.mxu0 0.0
    %791 = vmatpush1.msra.mxu0 0.0
    %792 = vmatprep.subr.mxu0 0.0
    %793 = vmatpush1.msra.mxu0 0.0
    %794 = vmatprep.subr.mxu0 0.0
    %795 = vmatpush1.msra.mxu0 0.0
    %796 = vmatprep.subr.mxu0 0.0
    %797 = vmatpush1.msra.mxu0 0.0
    %798 = vmatprep.subr.mxu0 0.0
    %799 = vmatpush1.msra.mxu0 0.0
    %800 = vmatprep.subr.mxu0 0.0
    %801 = vmatpush1.msra.mxu0 0.0
    %802 = vmatprep.subr.mxu0 0.0
    %803 = vmatpush1.msra.mxu0 0.0
    %804 = vmatprep.subr.mxu0 0.0
    %805 = vmatpush1.msra.mxu0 0.0
    %806 = vmatprep.subr.mxu0 0.0
    %807 = vmatpush1.msra.mxu0 0.0
    %808 = vmatprep.subr.mxu0 0.0
    %809 = vmatpush1.msra.mxu0 0.0
    %810 = vmatprep.mubr.f32.mxu0 0.0
    %811 = vmatmul.mubr.f32.gmra.mrb[0].mxu0 %v439
    %v812 = vpop.f32.mrb[0].mxu0
    %v813 = vadd.f32 %v477, %v812
    %v814 = vpop.f32.mrb[0].mxu0
    %815 = vmatprep.mubr.f32.mxu0 0.0
    %816 = vmatmul.mubr.f32.gmra.mrb[0].mxu0 %v444
    %v817 = vpop.f32.mrb[0].mxu0
    %v818 = vadd.f32 %v477, %v817
    %v819 = vpop.f32.mrb[0].mxu0
    %820 = vmatprep.mubr.f32.mxu0 0.0
    %821 = vmatmul.mubr.f32.gmra.mrb[0].mxu0 %v449
    %v822 = vpop.f32.mrb[0].mxu0
    %v823 = vadd.f32 %v477, %v822
    %v824 = vpop.f32.mrb[0].mxu0
    %825 = vmatprep.mubr.f32.mxu0 0.0
    %826 = vmatmul.mubr.f32.gmra.mrb[0].mxu0 %v454
    %v827 = vpop.f32.mrb[0].mxu0
    %v828 = vadd.f32 %v477, %v827
    %v829 = vpop.f32.mrb[0].mxu0
    %830 = vdwg.mxu0
    %831 = vst [vmem:[#allocation8 + $0x18] sm:$0xff] %v813
    %832 = vst [vmem:[#allocation8 + $0x40] sm:$0xff] %v818
    %833 = vst [vmem:[#allocation8 + $0x68] sm:$0xff] %v823
    %834 = vst [vmem:[#allocation8 + $0x90] sm:$0xff] %v828
    %835 = vmatprep.subr.mxu0 0.0
    %836 = vmatpush1.msra.mxu0 %v456
    %837 = vmatprep.subr.mxu0 0.0
    %838 = vmatpush1.msra.mxu0 %v457
    %839 = vmatprep.subr.mxu0 0.0
    %840 = vmatpush1.msra.mxu0 %v458
    %841 = vmatprep.subr.mxu0 0.0
    %842 = vmatpush1.msra.mxu0 %v459
    %843 = vmatprep.subr.mxu0 0.0
    %844 = vmatpush1.msra.mxu0 %v460
    %845 = vmatprep.subr.mxu0 0.0
    %846 = vmatpush1.msra.mxu0 %v461
    %847 = vmatprep.subr.mxu0 0.0
    %848 = vmatpush1.msra.mxu0 %v462
    %849 = vmatprep.subr.mxu0 0.0
    %850 = vmatpush1.msra.mxu0 %v463
    %851 = vmatprep.subr.mxu0 0.0
    %852 = vmatpush1.msra.mxu0 %v464
    %853 = vmatprep.subr.mxu0 0.0
    %854 = vmatpush1.msra.mxu0 %v465
    %855 = vmatprep.subr.mxu0 0.0
    %856 = vmatpush1.msra.mxu0 %v466
    %857 = vmatprep.subr.mxu0 0.0
    %858 = vmatpush1.msra.mxu0 %v467
    %859 = vmatprep.subr.mxu0 0.0
    %860 = vmatpush1.msra.mxu0 %v468
    %861 = vmatprep.subr.mxu0 0.0
    %862 = vmatpush1.msra.mxu0 %v469
    %863 = vmatprep.subr.mxu0 0.0
    %864 = vmatpush1.msra.mxu0 %v470
    %865 = vmatprep.subr.mxu0 0.0
    %866 = vmatpush1.msra.mxu0 %v471
    %867 = vmatprep.subr.mxu0 0.0
    %868 = vmatpush1.msra.mxu0 0.0
    %869 = vmatprep.subr.mxu0 0.0
    %870 = vmatpush1.msra.mxu0 0.0
    %871 = vmatprep.subr.mxu0 0.0
    %872 = vmatpush1.msra.mxu0 0.0
    %873 = vmatprep.subr.mxu0 0.0
    %874 = vmatpush1.msra.mxu0 0.0
    %875 = vmatprep.subr.mxu0 0.0
    %876 = vmatpush1.msra.mxu0 0.0
    %877 = vmatprep.subr.mxu0 0.0
    %878 = vmatpush1.msra.mxu0 0.0
    %879 = vmatprep.subr.mxu0 0.0
    %880 = vmatpush1.msra.mxu0 0.0
    %881 = vmatprep.subr.mxu0 0.0
    %882 = vmatpush1.msra.mxu0 0.0
    %883 = vmatprep.subr.mxu0 0.0
    %884 = vmatpush1.msra.mxu0 0.0
    %885 = vmatprep.subr.mxu0 0.0
    %886 = vmatpush1.msra.mxu0 0.0
    %887 = vmatprep.subr.mxu0 0.0
    %888 = vmatpush1.msra.mxu0 0.0
    %889 = vmatprep.subr.mxu0 0.0
    %890 = vmatpush1.msra.mxu0 0.0
    %891 = vmatprep.subr.mxu0 0.0
    %892 = vmatpush1.msra.mxu0 0.0
    %893 = vmatprep.subr.mxu0 0.0
    %894 = vmatpush1.msra.mxu0 0.0
    %895 = vmatprep.subr.mxu0 0.0
    %896 = vmatpush1.msra.mxu0 0.0
    %897 = vmatprep.subr.mxu0 0.0
    %898 = vmatpush1.msra.mxu0 0.0
    %899 = vmatprep.mubr.f32.mxu0 0.0
    %900 = vmatmul.mubr.f32.gmra.mrb[0].mxu0 %v440
    %v901 = vpop.f32.mrb[0].mxu0
    %v902 = vadd.f32 %v477, %v901
    %v903 = vpop.f32.mrb[0].mxu0
    %904 = vmatprep.mubr.f32.mxu0 0.0
    %905 = vmatmul.mubr.f32.gmra.mrb[0].mxu0 %v445
    %v906 = vpop.f32.mrb[0].mxu0
    %v907 = vadd.f32 %v477, %v906
    %v908 = vpop.f32.mrb[0].mxu0
    %909 = vmatprep.mubr.f32.mxu0 0.0
    %910 = vmatmul.mubr.f32.gmra.mrb[0].mxu0 %v450
    %v911 = vpop.f32.mrb[0].mxu0
    %v912 = vadd.f32 %v477, %v911
    %v913 = vpop.f32.mrb[0].mxu0
    %914 = vmatprep.mubr.f32.mxu0 0.0
    %915 = vmatmul.mubr.f32.gmra.mrb[0].mxu0 %v455
    %v916 = vpop.f32.mrb[0].mxu0
    %v917 = vadd.f32 %v477, %v916
    %v918 = vpop.f32.mrb[0].mxu0
    %919 = vdwg.mxu0
    %920 = vst [vmem:[#allocation8 + $0x20] sm:$0xff] %v902
    %921 = vst [vmem:[#allocation8 + $0x48] sm:$0xff] %v907
    %922 = vst [vmem:[#allocation8 + $0x70] sm:$0xff] %v912
    %923 = vst [vmem:[#allocation8 + $0x98] sm:$0xff] %v917
    // Predicated region
    $region34: #{tpu_custom_call.1} parent=1 // pred_check
      _
    $region35: #{tpu_custom_call.1} parent=1 // pred_check_branch
      %925 = sbr.rel (0) target = $region37
    $region36: #{tpu_custom_call.1} parent=1 // pred_region
      %s927 = ssub.s32 2560, 2560
      %928 = vsyncadd [#allocation4], %s927
      %s929 = sshll.u32 [#allocation8], 4
      %s930 = int_to_ptr.vmem [resolvable:$true] %s929
      %935 = dma.vmem_to_hbm [thread:$0]  %s930, 2560, %s5, [#allocation4], 640, 640, 40
    $region37: #{tpu_custom_call.1} parent=1 // pred_fallthru
      _
    // Predicated region
    $region38: #{tpu_custom_call.1} parent=1 // pred_check
      _
    $region39: #{tpu_custom_call.1} parent=1 // pred_check_branch
      %937 = sbr.rel (0) target = $region41
    $region40: #{tpu_custom_call.1} parent=1 // pred_region
      %938 = dma.done [#allocation4], 2560
    $region41: #{tpu_custom_call.1} parent=1 // pred_fallthru
      _
    %939 = vsyncpa [#allocation3], 1
    %940 = vsyncpa [#allocation6], 1
    %941 = vsyncpa [#allocation4], 1

</llo_original>
